<compile_context>
chip_gen: v7x
topology: tpu7x:2x2x1
jax: 0.10.0
libtpu: 0.0.40
codegen_flags: <defaults>
</compile_context>

<pallas_src>
import jax
import jax.numpy as jnp
from jax.experimental import pallas as pl
from jax.experimental.pallas import tpu as pltpu

LANE = 128  # TPU lane width.  (On v6e/v7x, 256-multiples for hidden dims are
            # even better when H is a free parameter; 128 keeps padding minimal.)


def _round_up(n, m):
    return ((n + m - 1) // m) * m


# ----------------------------------------------------------------------------- kernel


def _mish(x):
    # Mish(x) = x * tanh(softplus(x)) with ONE transcendental (exp) plus an
    # EUP approximate reciprocal:
    #   tanh(log1p(e^x)) = 1 - 2 / (1 + (1 + e^x)^2)
    # Overflow-safe in f32: e^x -> inf gives t -> 1 (mish -> x);
    # e^x -> 0 gives t -> 0 (mish -> 0).
    ex = jnp.exp(x)
    p = 1.0 + ex
    t = 1.0 - 2.0 * pl.reciprocal(1.0 + p * p, approx=True)
    return x * t


def _make_decode_kernel(use_z):
    def kernel(*refs):
        if use_z:
            (z_ref, s_ref, w1z_ref, w1s_ref, b1_ref, w2_ref, b2_ref,
             w3_ref, b3_ref, wf_ref, bf_ref, o_ref) = refs
        else:
            (s_ref, w1s_ref, b1_ref, w2_ref, b2_ref,
             w3_ref, b3_ref, wf_ref, bf_ref, o_ref) = refs

        # layer 1:  concat([z, state]) @ W1  ==  z @ W1z + state @ W1s
        acc = jnp.dot(s_ref[...], w1s_ref[...],
                      preferred_element_type=jnp.float32)
        if use_z:
            acc = acc + jnp.dot(z_ref[...], w1z_ref[...],
                                preferred_element_type=jnp.float32)
        h = _mish(acc + b1_ref[...]).astype(jnp.bfloat16)

        h = _mish(jnp.dot(h, w2_ref[...], preferred_element_type=jnp.float32)
                  + b2_ref[...]).astype(jnp.bfloat16)
        h = _mish(jnp.dot(h, w3_ref[...], preferred_element_type=jnp.float32)
                  + b3_ref[...]).astype(jnp.bfloat16)

        out = jnp.dot(h, wf_ref[...], preferred_element_type=jnp.float32) \
              + bf_ref[...]
        o_ref[...] = jnp.clip(out, -1.0, 1.0).astype(o_ref.dtype)

    return kernel


# ----------------------------------------------------------------------------- wrapper

# pl.Buffered(1) (single-buffering loop-invariant weights) is attempted first;
# if this JAX build rejects it we fall back to default buffering once.
_WEIGHT_SINGLE_BUFFER_OK = True
_WEIGHT_SINGLE_BUFFER_CHECKED = False


def _decode_call(z_p, state_p, p, *, use_z, tb, single_buffer_weights):
    Bp, Sp = state_p.shape
    Hp = p["w2"].shape[0]
    Ap = p["wf"].shape[1]
    grid = (Bp // tb,)

    def wspec(shape):
        if single_buffer_weights:
            # Loop-invariant operand: one buffer, no pointless double-buffering.
            return pl.BlockSpec(shape, lambda i: (0, 0),
                                pipeline_mode=pl.Buffered(1))
        return pl.BlockSpec(shape, lambda i: (0, 0))

    in_specs, operands = [], []
    if use_z:
        in_specs.append(pl.BlockSpec((tb, Hp), lambda i: (i, 0)))
        operands.append(z_p)
    in_specs.append(pl.BlockSpec((tb, Sp), lambda i: (i, 0)))
    operands.append(state_p)
    if use_z:
        in_specs.append(wspec((Hp, Hp)))
        operands.append(p["w1z"])
    in_specs += [wspec((Sp, Hp)), wspec((1, Hp)),
                 wspec((Hp, Hp)), wspec((1, Hp)),
                 wspec((Hp, Hp)), wspec((1, Hp)),
                 wspec((Hp, Ap)), wspec((1, Ap))]
    operands += [p["w1s"], p["b1"], p["w2"], p["b2"],
                 p["w3"], p["b3"], p["wf"], p["bf"]]

    # Explicit VMEM budget: resident weights + pipelined activation/output
    # tiles + headroom for f32 intermediates (capped below v7x physical VMEM).
    wbytes = sum(int(v.size) * v.dtype.itemsize for v in p.values())
    wbytes *= 1 if single_buffer_weights else 2
    abytes = 2 * tb * (Hp + Sp) * 2 + 2 * tb * Ap * 4      # double-buffered I/O
    scratch = 6 * tb * Hp * 4                               # f32 intermediates
    vmem_limit = int(min(64 * 1024 * 1024,
                         max(8 * 1024 * 1024, 2 * (wbytes + abytes + scratch))))

    return pl.pallas_call(
        _make_decode_kernel(use_z),
        out_shape=jax.ShapeDtypeStruct((Bp, Ap), jnp.float32),
        grid_spec=pltpu.PrefetchScalarGridSpec(
            num_scalar_prefetch=0,
            grid=grid,
            in_specs=in_specs,
            out_specs=pl.BlockSpec((tb, Ap), lambda i: (i, 0)),
        ),
        compiler_params=pltpu.CompilerParams(
            dimension_semantics=("parallel",),
            vmem_limit_bytes=vmem_limit),
    )(*operands)


def vae_forward(state, params, key=None, eval_mode=False, *,
                hidden_size, action_dim, tile_b=None):
    """Pallas implementation of VAE.forward(state, eval)."""
    global _WEIGHT_SINGLE_BUFFER_OK, _WEIGHT_SINGLE_BUFFER_CHECKED

    B, state_dim = state.shape
    H = hidden_size
    Hp = params["w2"].shape[0]
    Sp = params["w1s"].shape[0]
    use_z = not eval_mode

    # Batch tile: multiple of 16 (bf16 sublane packing), and >= 2 tiles so the
    # grid can be sharded across both TensorCores on v7x.
    tb = tile_b if tile_b is not None else min(256, max(16, _round_up(B // 2, 16)))
    tb = _round_up(tb, 16)
    Bp = _round_up(max(B, tb), tb)

    state_p = jnp.zeros((Bp, Sp), jnp.bfloat16).at[:B, :state_dim].set(
        state.astype(jnp.bfloat16))
    if use_z:
        z = jax.random.normal(key, (B, H), dtype=jnp.float32)
        z_p = jnp.zeros((Bp, Hp), jnp.bfloat16).at[:B, :H].set(
            z.astype(jnp.bfloat16))
    else:
        z_p = None  # z == 0: the z @ W1z term (and the randn) is skipped.

    kwargs = dict(use_z=use_z, tb=tb)
    if _WEIGHT_SINGLE_BUFFER_OK and not _WEIGHT_SINGLE_BUFFER_CHECKED:
        try:
            out = _decode_call(z_p, state_p, params,
                               single_buffer_weights=True, **kwargs)
            out = jax.block_until_ready(out)
            _WEIGHT_SINGLE_BUFFER_CHECKED = True
        except Exception:
            _WEIGHT_SINGLE_BUFFER_OK = False
            out = _decode_call(z_p, state_p, params,
                               single_buffer_weights=False, **kwargs)
    else:
        out = _decode_call(z_p, state_p, params,
                           single_buffer_weights=_WEIGHT_SINGLE_BUFFER_OK,
                           **kwargs)

    return out[:B, :action_dim]


# ----------------------------------------------------------------------------- params


def init_raw_params(key, state_dim, action_dim, hidden_size):
    """Synthetic decoder + final-layer params, stored transposed: (in, out)."""
    H = hidden_size
    ks = jax.random.split(key, 8)
    scale = 0.1

    def lin(kw, kb, din, dout):
        w = scale * jax.random.normal(kw, (din, dout), dtype=jnp.float32)
        b = scale * jax.random.normal(kb, (1, dout), dtype=jnp.float32)
        return w, b

    w1, b1 = lin(ks[0], ks[1], H + state_dim, H)
    w2, b2 = lin(ks[2], ks[3], H, H)
    w3, b3 = lin(ks[4], ks[5], H, H)
    wf, bf = lin(ks[6], ks[7], H, action_dim)
    return dict(w1=w1, b1=b1, w2=w2, b2=b2, w3=w3, b3=b3, fin_w=wf, fin_b=bf)


def pack_params(raw, state_dim, action_dim, hidden_size):
    """Lane-pad every feature dim to a multiple of 128, split W1 into its
    z / state halves (so the concat never materializes) and cast the weights
    to bf16 (accumulation stays f32 in-kernel).  Biases stay f32."""
    H = hidden_size
    Hp = _round_up(H, LANE)
    Sp = _round_up(state_dim, LANE)
    Ap = _round_up(action_dim, LANE)

    def pad_w(w, rp, cp):
        r, c = w.shape
        return jnp.pad(w, ((0, rp - r), (0, cp - c))).astype(jnp.bfloat16)

    def pad_b(b, cp):
        return jnp.pad(b, ((0, 0), (0, cp - b.shape[1]))).astype(jnp.float32)

    return dict(
        w1z=pad_w(raw["w1"][:H], Hp, Hp),
        w1s=pad_w(raw["w1"][H:], Sp, Hp),
        b1=pad_b(raw["b1"], Hp),
        w2=pad_w(raw["w2"], Hp, Hp), b2=pad_b(raw["b2"], Hp),
        w3=pad_w(raw["w3"], Hp, Hp), b3=pad_b(raw["b3"], Hp),
        wf=pad_w(raw["fin_w"], Hp, Ap), bf=pad_b(raw["fin_b"], Ap),
    )


# ----------------------------------------------------------------------------- reference


def _reference_forward(state, raw, z):
    """Pure-JAX reference mirroring the PyTorch decode/final/clamp path with
    the same bf16 operand quantization the kernel uses (f32 accumulation)."""
    bf = lambda a: a.astype(jnp.bfloat16).astype(jnp.float32)
    mish = lambda x: x * jnp.tanh(jax.nn.softplus(x))
    x = bf(jnp.concatenate([z, state], axis=-1))
    h = mish(x @ bf(raw["w1"]) + raw["b1"])
    h = mish(bf(h) @ bf(raw["w2"]) + raw["b2"])
    h = mish(bf(h) @ bf(raw["w3"]) + raw["b3"])
    out = bf(h) @ bf(raw["fin_w"]) + raw["fin_b"]
    return jnp.clip(out, -1.0, 1.0)


# TODO(synk): encode()/fc_mu/fc_var/loss() are not part of VAE.forward(); only
# the decode + final_layer + clamp path is implemented as a kernel.

if __name__ == "__main__":
    B, STATE_DIM, ACTION_DIM, HIDDEN = 64, 16, 8, 32

    root = jax.random.PRNGKey(0)
    k_param, k_state, k_z = jax.random.split(root, 3)

    raw = init_raw_params(k_param, STATE_DIM, ACTION_DIM, HIDDEN)
    params = pack_params(raw, STATE_DIM, ACTION_DIM, HIDDEN)
    state = jax.random.normal(k_state, (B, STATE_DIM), dtype=jnp.float32)

    # eval=False path (z ~ N(0,1)), batch tiled 64 -> 4 grid steps of 16 rows.
    out = vae_forward(state, params, key=k_z, eval_mode=False,
                      hidden_size=HIDDEN, action_dim=ACTION_DIM, tile_b=16)
    out = jax.block_until_ready(out)
    assert out.shape == (B, ACTION_DIM)

    # Cross-check against the bf16-quantized pure-JAX reference (same z).
    z = jax.random.normal(k_z, (B, HIDDEN), dtype=jnp.float32)
    ref = _reference_forward(state, raw, z)
    err = float(jnp.max(jnp.abs(out - ref)))
    assert jnp.allclose(out, ref, atol=1e-2, rtol=1e-2), err

    # eval=True path (z = 0 -> z-branch skipped entirely).
    out_eval = jax.block_until_ready(
        vae_forward(state, params, eval_mode=True,
                    hidden_size=HIDDEN, action_dim=ACTION_DIM, tile_b=16))
    ref_eval = _reference_forward(state, raw,
                                  jnp.zeros((B, HIDDEN), jnp.float32))
    assert out_eval.shape == (B, ACTION_DIM)
    assert jnp.allclose(out_eval, ref_eval, atol=1e-2, rtol=1e-2)

    print("KERNEL_OK")
</pallas_src>

<mosaic_0001>
module attributes {stable_mosaic.version = 11 : i64} {
  func.func @kernel(%arg0: i32, %arg1: memref<16x128xbf16, #tpu.memory_space<vmem>>, %arg2: memref<16x128xbf16, #tpu.memory_space<vmem>>, %arg3: memref<128x128xbf16, #tpu.memory_space<vmem>>, %arg4: memref<128x128xbf16, #tpu.memory_space<vmem>>, %arg5: memref<1x128xf32, #tpu.memory_space<vmem>>, %arg6: memref<128x128xbf16, #tpu.memory_space<vmem>>, %arg7: memref<1x128xf32, #tpu.memory_space<vmem>>, %arg8: memref<128x128xbf16, #tpu.memory_space<vmem>>, %arg9: memref<1x128xf32, #tpu.memory_space<vmem>>, %arg10: memref<128x128xbf16, #tpu.memory_space<vmem>>, %arg11: memref<1x128xf32, #tpu.memory_space<vmem>>, %arg12: memref<16x128xf32, #tpu.memory_space<vmem>>) attributes {dimension_semantics = [#tpu.dimension_semantics<parallel>], iteration_bounds = array<i64: 4>, scalar_prefetch = 0 : i64, scratch_operands = 0 : i64, tpu.core_type = #tpu.core_type<tc>, window_params = [{transform_indices = @transform_0, window_bounds = array<i64: 16, 128>}, {transform_indices = @transform_1, window_bounds = array<i64: 16, 128>}, {pipeline_mode = #tpu.pipeline_mode<synchronous>, transform_indices = @transform_2, window_bounds = array<i64: 128, 128>}, {pipeline_mode = #tpu.pipeline_mode<synchronous>, transform_indices = @transform_3, window_bounds = array<i64: 128, 128>}, {pipeline_mode = #tpu.pipeline_mode<synchronous>, transform_indices = @transform_4, window_bounds = array<i64: 1, 128>}, {pipeline_mode = #tpu.pipeline_mode<synchronous>, transform_indices = @transform_5, window_bounds = array<i64: 128, 128>}, {pipeline_mode = #tpu.pipeline_mode<synchronous>, transform_indices = @transform_6, window_bounds = array<i64: 1, 128>}, {pipeline_mode = #tpu.pipeline_mode<synchronous>, transform_indices = @transform_7, window_bounds = array<i64: 128, 128>}, {pipeline_mode = #tpu.pipeline_mode<synchronous>, transform_indices = @transform_8, window_bounds = array<i64: 1, 128>}, {pipeline_mode = #tpu.pipeline_mode<synchronous>, transform_indices = @transform_9, window_bounds = array<i64: 128, 128>}, {pipeline_mode = #tpu.pipeline_mode<synchronous>, transform_indices = @transform_10, window_bounds = array<i64: 1, 128>}, {transform_indices = @transform_11, window_bounds = array<i64: 16, 128>}]} {
    %c0 = arith.constant 0 : index
    %c0_0 = arith.constant 0 : index
    %0 = vector.load %arg2[%c0, %c0_0] : memref<16x128xbf16, #tpu.memory_space<vmem>>, vector<16x128xbf16>
    %c0_1 = arith.constant 0 : index
    %c0_2 = arith.constant 0 : index
    %1 = vector.load %arg4[%c0_1, %c0_2] : memref<128x128xbf16, #tpu.memory_space<vmem>>, vector<128x128xbf16>
    %cst = arith.constant dense<0.000000e+00> : vector<16x128xf32>
    %2 = tpu.matmul %0, %1, %cst {dimension_numbers = #tpu.dot_dimension_numbers<[1], [0], [0], [1], [0, 0, 1, 1], [], []>} : vector<16x128xbf16>, vector<128x128xbf16>, vector<16x128xf32> -> vector<16x128xf32>
    %c0_3 = arith.constant 0 : index
    %c0_4 = arith.constant 0 : index
    %3 = vector.load %arg1[%c0_3, %c0_4] : memref<16x128xbf16, #tpu.memory_space<vmem>>, vector<16x128xbf16>
    %c0_5 = arith.constant 0 : index
    %c0_6 = arith.constant 0 : index
    %4 = vector.load %arg3[%c0_5, %c0_6] : memref<128x128xbf16, #tpu.memory_space<vmem>>, vector<128x128xbf16>
    %cst_7 = arith.constant dense<0.000000e+00> : vector<16x128xf32>
    %5 = tpu.matmul %3, %4, %cst_7 {dimension_numbers = #tpu.dot_dimension_numbers<[1], [0], [0], [1], [0, 0, 1, 1], [], []>} : vector<16x128xbf16>, vector<128x128xbf16>, vector<16x128xf32> -> vector<16x128xf32>
    %6 = arith.addf %2, %5 : vector<16x128xf32>
    %c0_8 = arith.constant 0 : index
    %c0_9 = arith.constant 0 : index
    %7 = vector.load %arg5[%c0_8, %c0_9] : memref<1x128xf32, #tpu.memory_space<vmem>>, vector<1x128xf32>
    %8 = vector.broadcast %7 : vector<1x128xf32> to vector<16x128xf32>
    %9 = arith.addf %6, %8 : vector<16x128xf32>
    %10 = math.exp %9 : vector<16x128xf32>
    %cst_10 = arith.constant 1.000000e+00 : f32
    %11 = vector.broadcast %cst_10 : f32 to vector<16x128xf32>
    %12 = arith.addf %11, %10 : vector<16x128xf32>
    %13 = arith.mulf %12, %12 : vector<16x128xf32>
    %cst_11 = arith.constant 1.000000e+00 : f32
    %14 = vector.broadcast %cst_11 : f32 to vector<16x128xf32>
    %15 = arith.addf %14, %13 : vector<16x128xf32>
    %16 = tpu.reciprocal %15 {approx = true} : vector<16x128xf32> -> vector<16x128xf32>
    %cst_12 = arith.constant 2.000000e+00 : f32
    %17 = vector.broadcast %cst_12 : f32 to vector<16x128xf32>
    %18 = arith.mulf %17, %16 : vector<16x128xf32>
    %cst_13 = arith.constant 1.000000e+00 : f32
    %19 = vector.broadcast %cst_13 : f32 to vector<16x128xf32>
    %20 = arith.subf %19, %18 : vector<16x128xf32>
    %21 = arith.mulf %9, %20 : vector<16x128xf32>
    %22 = arith.truncf %21 : vector<16x128xf32> to vector<16x128xbf16>
    %c0_14 = arith.constant 0 : index
    %c0_15 = arith.constant 0 : index
    %23 = vector.load %arg6[%c0_14, %c0_15] : memref<128x128xbf16, #tpu.memory_space<vmem>>, vector<128x128xbf16>
    %cst_16 = arith.constant dense<0.000000e+00> : vector<16x128xf32>
    %24 = tpu.matmul %22, %23, %cst_16 {dimension_numbers = #tpu.dot_dimension_numbers<[1], [0], [0], [1], [0, 0, 1, 1], [], []>} : vector<16x128xbf16>, vector<128x128xbf16>, vector<16x128xf32> -> vector<16x128xf32>
    %c0_17 = arith.constant 0 : index
    %c0_18 = arith.constant 0 : index
    %25 = vector.load %arg7[%c0_17, %c0_18] : memref<1x128xf32, #tpu.memory_space<vmem>>, vector<1x128xf32>
    %26 = vector.broadcast %25 : vector<1x128xf32> to vector<16x128xf32>
    %27 = arith.addf %24, %26 : vector<16x128xf32>
    %28 = math.exp %27 : vector<16x128xf32>
    %cst_19 = arith.constant 1.000000e+00 : f32
    %29 = vector.broadcast %cst_19 : f32 to vector<16x128xf32>
    %30 = arith.addf %29, %28 : vector<16x128xf32>
    %31 = arith.mulf %30, %30 : vector<16x128xf32>
    %cst_20 = arith.constant 1.000000e+00 : f32
    %32 = vector.broadcast %cst_20 : f32 to vector<16x128xf32>
    %33 = arith.addf %32, %31 : vector<16x128xf32>
    %34 = tpu.reciprocal %33 {approx = true} : vector<16x128xf32> -> vector<16x128xf32>
    %cst_21 = arith.constant 2.000000e+00 : f32
    %35 = vector.broadcast %cst_21 : f32 to vector<16x128xf32>
    %36 = arith.mulf %35, %34 : vector<16x128xf32>
    %cst_22 = arith.constant 1.000000e+00 : f32
    %37 = vector.broadcast %cst_22 : f32 to vector<16x128xf32>
    %38 = arith.subf %37, %36 : vector<16x128xf32>
    %39 = arith.mulf %27, %38 : vector<16x128xf32>
    %40 = arith.truncf %39 : vector<16x128xf32> to vector<16x128xbf16>
    %c0_23 = arith.constant 0 : index
    %c0_24 = arith.constant 0 : index
    %41 = vector.load %arg8[%c0_23, %c0_24] : memref<128x128xbf16, #tpu.memory_space<vmem>>, vector<128x128xbf16>
    %cst_25 = arith.constant dense<0.000000e+00> : vector<16x128xf32>
    %42 = tpu.matmul %40, %41, %cst_25 {dimension_numbers = #tpu.dot_dimension_numbers<[1], [0], [0], [1], [0, 0, 1, 1], [], []>} : vector<16x128xbf16>, vector<128x128xbf16>, vector<16x128xf32> -> vector<16x128xf32>
    %c0_26 = arith.constant 0 : index
    %c0_27 = arith.constant 0 : index
    %43 = vector.load %arg9[%c0_26, %c0_27] : memref<1x128xf32, #tpu.memory_space<vmem>>, vector<1x128xf32>
    %44 = vector.broadcast %43 : vector<1x128xf32> to vector<16x128xf32>
    %45 = arith.addf %42, %44 : vector<16x128xf32>
    %46 = math.exp %45 : vector<16x128xf32>
    %cst_28 = arith.constant 1.000000e+00 : f32
    %47 = vector.broadcast %cst_28 : f32 to vector<16x128xf32>
    %48 = arith.addf %47, %46 : vector<16x128xf32>
    %49 = arith.mulf %48, %48 : vector<16x128xf32>
    %cst_29 = arith.constant 1.000000e+00 : f32
    %50 = vector.broadcast %cst_29 : f32 to vector<16x128xf32>
    %51 = arith.addf %50, %49 : vector<16x128xf32>
    %52 = tpu.reciprocal %51 {approx = true} : vector<16x128xf32> -> vector<16x128xf32>
    %cst_30 = arith.constant 2.000000e+00 : f32
    %53 = vector.broadcast %cst_30 : f32 to vector<16x128xf32>
    %54 = arith.mulf %53, %52 : vector<16x128xf32>
    %cst_31 = arith.constant 1.000000e+00 : f32
    %55 = vector.broadcast %cst_31 : f32 to vector<16x128xf32>
    %56 = arith.subf %55, %54 : vector<16x128xf32>
    %57 = arith.mulf %45, %56 : vector<16x128xf32>
    %58 = arith.truncf %57 : vector<16x128xf32> to vector<16x128xbf16>
    %c0_32 = arith.constant 0 : index
    %c0_33 = arith.constant 0 : index
    %59 = vector.load %arg10[%c0_32, %c0_33] : memref<128x128xbf16, #tpu.memory_space<vmem>>, vector<128x128xbf16>
    %cst_34 = arith.constant dense<0.000000e+00> : vector<16x128xf32>
    %60 = tpu.matmul %58, %59, %cst_34 {dimension_numbers = #tpu.dot_dimension_numbers<[1], [0], [0], [1], [0, 0, 1, 1], [], []>} : vector<16x128xbf16>, vector<128x128xbf16>, vector<16x128xf32> -> vector<16x128xf32>
    %c0_35 = arith.constant 0 : index
    %c0_36 = arith.constant 0 : index
    %61 = vector.load %arg11[%c0_35, %c0_36] : memref<1x128xf32, #tpu.memory_space<vmem>>, vector<1x128xf32>
    %62 = vector.broadcast %61 : vector<1x128xf32> to vector<16x128xf32>
    %63 = arith.addf %60, %62 : vector<16x128xf32>
    %cst_37 = arith.constant -1.000000e+00 : f32
    %cst_38 = arith.constant 1.000000e+00 : f32
    %64 = vector.broadcast %cst_37 : f32 to vector<16x128xf32>
    %65 = arith.maximumf %64, %63 : vector<16x128xf32>
    %66 = vector.broadcast %cst_38 : f32 to vector<16x128xf32>
    %67 = arith.minimumf %66, %65 : vector<16x128xf32>
    %c0_39 = arith.constant 0 : index
    %c0_40 = arith.constant 0 : index
    %68 = vector.load %arg12[%c0_39, %c0_40] : memref<16x128xf32, #tpu.memory_space<vmem>>, vector<16x128xf32>
    tpu.vector_store %arg12[%c0_39, %c0_40], %67 {strides = array<i32>} : memref<16x128xf32, #tpu.memory_space<vmem>>, vector<16x128xf32>,
    return
  }
  func.func @transform_0(%arg0: i32) -> (i32, i32) {
    %c0_i32 = arith.constant 0 : i32
    %c0_i32_0 = arith.constant 0 : i32
    return %arg0, %c0_i32 : i32, i32
  }
  func.func @transform_1(%arg0: i32) -> (i32, i32) {
    %c0_i32 = arith.constant 0 : i32
    %c0_i32_0 = arith.constant 0 : i32
    return %arg0, %c0_i32 : i32, i32
  }
  func.func @transform_2(%arg0: i32) -> (i32, i32) {
    %c0_i32 = arith.constant 0 : i32
    %c0_i32_0 = arith.constant 0 : i32
    %c0_i32_1 = arith.constant 0 : i32
    return %c0_i32, %c0_i32_0 : i32, i32
  }
  func.func @transform_3(%arg0: i32) -> (i32, i32) {
    %c0_i32 = arith.constant 0 : i32
    %c0_i32_0 = arith.constant 0 : i32
    %c0_i32_1 = arith.constant 0 : i32
    return %c0_i32, %c0_i32_0 : i32, i32
  }
  func.func @transform_4(%arg0: i32) -> (i32, i32) {
    %c0_i32 = arith.constant 0 : i32
    %c0_i32_0 = arith.constant 0 : i32
    %c0_i32_1 = arith.constant 0 : i32
    return %c0_i32, %c0_i32_0 : i32, i32
  }
  func.func @transform_5(%arg0: i32) -> (i32, i32) {
    %c0_i32 = arith.constant 0 : i32
    %c0_i32_0 = arith.constant 0 : i32
    %c0_i32_1 = arith.constant 0 : i32
    return %c0_i32, %c0_i32_0 : i32, i32
  }
  func.func @transform_6(%arg0: i32) -> (i32, i32) {
    %c0_i32 = arith.constant 0 : i32
    %c0_i32_0 = arith.constant 0 : i32
    %c0_i32_1 = arith.constant 0 : i32
    return %c0_i32, %c0_i32_0 : i32, i32
  }
  func.func @transform_7(%arg0: i32) -> (i32, i32) {
    %c0_i32 = arith.constant 0 : i32
    %c0_i32_0 = arith.constant 0 : i32
    %c0_i32_1 = arith.constant 0 : i32
    return %c0_i32, %c0_i32_0 : i32, i32
  }
  func.func @transform_8(%arg0: i32) -> (i32, i32) {
    %c0_i32 = arith.constant 0 : i32
    %c0_i32_0 = arith.constant 0 : i32
    %c0_i32_1 = arith.constant 0 : i32
    return %c0_i32, %c0_i32_0 : i32, i32
  }
  func.func @transform_9(%arg0: i32) -> (i32, i32) {
    %c0_i32 = arith.constant 0 : i32
    %c0_i32_0 = arith.constant 0 : i32
    %c0_i32_1 = arith.constant 0 : i32
    return %c0_i32, %c0_i32_0 : i32, i32
  }
  func.func @transform_10(%arg0: i32) -> (i32, i32) {
    %c0_i32 = arith.constant 0 : i32
    %c0_i32_0 = arith.constant 0 : i32
    %c0_i32_1 = arith.constant 0 : i32
    return %c0_i32, %c0_i32_0 : i32, i32
  }
  func.func @transform_11(%arg0: i32) -> (i32, i32) {
    %c0_i32 = arith.constant 0 : i32
    %c0_i32_0 = arith.constant 0 : i32
    return %arg0, %c0_i32 : i32, i32
  }
}

module attributes {stable_mosaic.version = 11 : i64} {
  func.func @kernel(%arg0: i32, %arg1: memref<16x128xbf16, #tpu.memory_space<vmem>>, %arg2: memref<16x128xbf16, #tpu.memory_space<vmem>>, %arg3: memref<128x128xbf16, #tpu.memory_space<vmem>>, %arg4: memref<128x128xbf16, #tpu.memory_space<vmem>>, %arg5: memref<1x128xf32, #tpu.memory_space<vmem>>, %arg6: memref<128x128xbf16, #tpu.memory_space<vmem>>, %arg7: memref<1x128xf32, #tpu.memory_space<vmem>>, %arg8: memref<128x128xbf16, #tpu.memory_space<vmem>>, %arg9: memref<1x128xf32, #tpu.memory_space<vmem>>, %arg10: memref<128x128xbf16, #tpu.memory_space<vmem>>, %arg11: memref<1x128xf32, #tpu.memory_space<vmem>>, %arg12: memref<16x128xf32, #tpu.memory_space<vmem>>) attributes {dimension_semantics = [#tpu.dimension_semantics<parallel>], iteration_bounds = array<i64: 4>, scalar_prefetch = 0 : i64, scratch_operands = 0 : i64, tpu.core_type = #tpu.core_type<tc>, window_params = [{transform_indices = @transform_0, window_bounds = array<i64: 16, 128>}, {transform_indices = @transform_1, window_bounds = array<i64: 16, 128>}, {pipeline_mode = #tpu.pipeline_mode<synchronous>, transform_indices = @transform_2, window_bounds = array<i64: 128, 128>}, {pipeline_mode = #tpu.pipeline_mode<synchronous>, transform_indices = @transform_3, window_bounds = array<i64: 128, 128>}, {pipeline_mode = #tpu.pipeline_mode<synchronous>, transform_indices = @transform_4, window_bounds = array<i64: 1, 128>}, {pipeline_mode = #tpu.pipeline_mode<synchronous>, transform_indices = @transform_5, window_bounds = array<i64: 128, 128>}, {pipeline_mode = #tpu.pipeline_mode<synchronous>, transform_indices = @transform_6, window_bounds = array<i64: 1, 128>}, {pipeline_mode = #tpu.pipeline_mode<synchronous>, transform_indices = @transform_7, window_bounds = array<i64: 128, 128>}, {pipeline_mode = #tpu.pipeline_mode<synchronous>, transform_indices = @transform_8, window_bounds = array<i64: 1, 128>}, {pipeline_mode = #tpu.pipeline_mode<synchronous>, transform_indices = @transform_9, window_bounds = array<i64: 128, 128>}, {pipeline_mode = #tpu.pipeline_mode<synchronous>, transform_indices = @transform_10, window_bounds = array<i64: 1, 128>}, {transform_indices = @transform_11, window_bounds = array<i64: 16, 128>}]} {
    %c0 = arith.constant 0 : index
    %c0_0 = arith.constant 0 : index
    %0 = vector.load %arg2[%c0, %c0_0] : memref<16x128xbf16, #tpu.memory_space<vmem>>, vector<16x128xbf16>
    %c0_1 = arith.constant 0 : index
    %c0_2 = arith.constant 0 : index
    %1 = vector.load %arg4[%c0_1, %c0_2] : memref<128x128xbf16, #tpu.memory_space<vmem>>, vector<128x128xbf16>
    %cst = arith.constant dense<0.000000e+00> : vector<16x128xf32>
    %2 = tpu.matmul %0, %1, %cst {dimension_numbers = #tpu.dot_dimension_numbers<[1], [0], [0], [1], [0, 0, 1, 1], [], []>} : vector<16x128xbf16>, vector<128x128xbf16>, vector<16x128xf32> -> vector<16x128xf32>
    %c0_3 = arith.constant 0 : index
    %c0_4 = arith.constant 0 : index
    %3 = vector.load %arg1[%c0_3, %c0_4] : memref<16x128xbf16, #tpu.memory_space<vmem>>, vector<16x128xbf16>
    %c0_5 = arith.constant 0 : index
    %c0_6 = arith.constant 0 : index
    %4 = vector.load %arg3[%c0_5, %c0_6] : memref<128x128xbf16, #tpu.memory_space<vmem>>, vector<128x128xbf16>
    %cst_7 = arith.constant dense<0.000000e+00> : vector<16x128xf32>
    %5 = tpu.matmul %3, %4, %cst_7 {dimension_numbers = #tpu.dot_dimension_numbers<[1], [0], [0], [1], [0, 0, 1, 1], [], []>} : vector<16x128xbf16>, vector<128x128xbf16>, vector<16x128xf32> -> vector<16x128xf32>
    %6 = arith.addf %2, %5 : vector<16x128xf32>
    %c0_8 = arith.constant 0 : index
    %c0_9 = arith.constant 0 : index
    %7 = vector.load %arg5[%c0_8, %c0_9] : memref<1x128xf32, #tpu.memory_space<vmem>>, vector<1x128xf32>
    %8 = vector.broadcast %7 : vector<1x128xf32> to vector<16x128xf32>
    %9 = arith.addf %6, %8 : vector<16x128xf32>
    %10 = math.exp %9 : vector<16x128xf32>
    %cst_10 = arith.constant 1.000000e+00 : f32
    %11 = vector.broadcast %cst_10 : f32 to vector<16x128xf32>
    %12 = arith.addf %11, %10 : vector<16x128xf32>
    %13 = arith.mulf %12, %12 : vector<16x128xf32>
    %cst_11 = arith.constant 1.000000e+00 : f32
    %14 = vector.broadcast %cst_11 : f32 to vector<16x128xf32>
    %15 = arith.addf %14, %13 : vector<16x128xf32>
    %16 = tpu.reciprocal %15 {approx = true} : vector<16x128xf32> -> vector<16x128xf32>
    %cst_12 = arith.constant 2.000000e+00 : f32
    %17 = vector.broadcast %cst_12 : f32 to vector<16x128xf32>
    %18 = arith.mulf %17, %16 : vector<16x128xf32>
    %cst_13 = arith.constant 1.000000e+00 : f32
    %19 = vector.broadcast %cst_13 : f32 to vector<16x128xf32>
    %20 = arith.subf %19, %18 : vector<16x128xf32>
    %21 = arith.mulf %9, %20 : vector<16x128xf32>
    %22 = arith.truncf %21 : vector<16x128xf32> to vector<16x128xbf16>
    %c0_14 = arith.constant 0 : index
    %c0_15 = arith.constant 0 : index
    %23 = vector.load %arg6[%c0_14, %c0_15] : memref<128x128xbf16, #tpu.memory_space<vmem>>, vector<128x128xbf16>
    %cst_16 = arith.constant dense<0.000000e+00> : vector<16x128xf32>
    %24 = tpu.matmul %22, %23, %cst_16 {dimension_numbers = #tpu.dot_dimension_numbers<[1], [0], [0], [1], [0, 0, 1, 1], [], []>} : vector<16x128xbf16>, vector<128x128xbf16>, vector<16x128xf32> -> vector<16x128xf32>
    %c0_17 = arith.constant 0 : index
    %c0_18 = arith.constant 0 : index
    %25 = vector.load %arg7[%c0_17, %c0_18] : memref<1x128xf32, #tpu.memory_space<vmem>>, vector<1x128xf32>
    %26 = vector.broadcast %25 : vector<1x128xf32> to vector<16x128xf32>
    %27 = arith.addf %24, %26 : vector<16x128xf32>
    %28 = math.exp %27 : vector<16x128xf32>
    %cst_19 = arith.constant 1.000000e+00 : f32
    %29 = vector.broadcast %cst_19 : f32 to vector<16x128xf32>
    %30 = arith.addf %29, %28 : vector<16x128xf32>
    %31 = arith.mulf %30, %30 : vector<16x128xf32>
    %cst_20 = arith.constant 1.000000e+00 : f32
    %32 = vector.broadcast %cst_20 : f32 to vector<16x128xf32>
    %33 = arith.addf %32, %31 : vector<16x128xf32>
    %34 = tpu.reciprocal %33 {approx = true} : vector<16x128xf32> -> vector<16x128xf32>
    %cst_21 = arith.constant 2.000000e+00 : f32
    %35 = vector.broadcast %cst_21 : f32 to vector<16x128xf32>
    %36 = arith.mulf %35, %34 : vector<16x128xf32>
    %cst_22 = arith.constant 1.000000e+00 : f32
    %37 = vector.broadcast %cst_22 : f32 to vector<16x128xf32>
    %38 = arith.subf %37, %36 : vector<16x128xf32>
    %39 = arith.mulf %27, %38 : vector<16x128xf32>
    %40 = arith.truncf %39 : vector<16x128xf32> to vector<16x128xbf16>
    %c0_23 = arith.constant 0 : index
    %c0_24 = arith.constant 0 : index
    %41 = vector.load %arg8[%c0_23, %c0_24] : memref<128x128xbf16, #tpu.memory_space<vmem>>, vector<128x128xbf16>
    %cst_25 = arith.constant dense<0.000000e+00> : vector<16x128xf32>
    %42 = tpu.matmul %40, %41, %cst_25 {dimension_numbers = #tpu.dot_dimension_numbers<[1], [0], [0], [1], [0, 0, 1, 1], [], []>} : vector<16x128xbf16>, vector<128x128xbf16>, vector<16x128xf32> -> vector<16x128xf32>
    %c0_26 = arith.constant 0 : index
    %c0_27 = arith.constant 0 : index
    %43 = vector.load %arg9[%c0_26, %c0_27] : memref<1x128xf32, #tpu.memory_space<vmem>>, vector<1x128xf32>
    %44 = vector.broadcast %43 : vector<1x128xf32> to vector<16x128xf32>
    %45 = arith.addf %42, %44 : vector<16x128xf32>
    %46 = math.exp %45 : vector<16x128xf32>
    %cst_28 = arith.constant 1.000000e+00 : f32
    %47 = vector.broadcast %cst_28 : f32 to vector<16x128xf32>
    %48 = arith.addf %47, %46 : vector<16x128xf32>
    %49 = arith.mulf %48, %48 : vector<16x128xf32>
    %cst_29 = arith.constant 1.000000e+00 : f32
    %50 = vector.broadcast %cst_29 : f32 to vector<16x128xf32>
    %51 = arith.addf %50, %49 : vector<16x128xf32>
    %52 = tpu.reciprocal %51 {approx = true} : vector<16x128xf32> -> vector<16x128xf32>
    %cst_30 = arith.constant 2.000000e+00 : f32
    %53 = vector.broadcast %cst_30 : f32 to vector<16x128xf32>
    %54 = arith.mulf %53, %52 : vector<16x128xf32>
    %cst_31 = arith.constant 1.000000e+00 : f32
    %55 = vector.broadcast %cst_31 : f32 to vector<16x128xf32>
    %56 = arith.subf %55, %54 : vector<16x128xf32>
    %57 = arith.mulf %45, %56 : vector<16x128xf32>
    %58 = arith.truncf %57 : vector<16x128xf32> to vector<16x128xbf16>
    %c0_32 = arith.constant 0 : index
    %c0_33 = arith.constant 0 : index
    %59 = vector.load %arg10[%c0_32, %c0_33] : memref<128x128xbf16, #tpu.memory_space<vmem>>, vector<128x128xbf16>
    %cst_34 = arith.constant dense<0.000000e+00> : vector<16x128xf32>
    %60 = tpu.matmul %58, %59, %cst_34 {dimension_numbers = #tpu.dot_dimension_numbers<[1], [0], [0], [1], [0, 0, 1, 1], [], []>} : vector<16x128xbf16>, vector<128x128xbf16>, vector<16x128xf32> -> vector<16x128xf32>
    %c0_35 = arith.constant 0 : index
    %c0_36 = arith.constant 0 : index
    %61 = vector.load %arg11[%c0_35, %c0_36] : memref<1x128xf32, #tpu.memory_space<vmem>>, vector<1x128xf32>
    %62 = vector.broadcast %61 : vector<1x128xf32> to vector<16x128xf32>
    %63 = arith.addf %60, %62 : vector<16x128xf32>
    %cst_37 = arith.constant -1.000000e+00 : f32
    %cst_38 = arith.constant 1.000000e+00 : f32
    %64 = vector.broadcast %cst_37 : f32 to vector<16x128xf32>
    %65 = arith.maximumf %64, %63 : vector<16x128xf32>
    %66 = vector.broadcast %cst_38 : f32 to vector<16x128xf32>
    %67 = arith.minimumf %66, %65 : vector<16x128xf32>
    %c0_39 = arith.constant 0 : index
    %c0_40 = arith.constant 0 : index
    %68 = vector.load %arg12[%c0_39, %c0_40] : memref<16x128xf32, #tpu.memory_space<vmem>>, vector<16x128xf32>
    tpu.vector_store %arg12[%c0_39, %c0_40], %67 {strides = array<i32>} : memref<16x128xf32, #tpu.memory_space<vmem>>, vector<16x128xf32>,
    return
  }
  func.func @transform_0(%arg0: i32) -> (i32, i32) {
    %c0_i32 = arith.constant 0 : i32
    %c0_i32_0 = arith.constant 0 : i32
    return %arg0, %c0_i32 : i32, i32
  }
  func.func @transform_1(%arg0: i32) -> (i32, i32) {
    %c0_i32 = arith.constant 0 : i32
    %c0_i32_0 = arith.constant 0 : i32
    return %arg0, %c0_i32 : i32, i32
  }
  func.func @transform_2(%arg0: i32) -> (i32, i32) {
    %c0_i32 = arith.constant 0 : i32
    %c0_i32_0 = arith.constant 0 : i32
    %c0_i32_1 = arith.constant 0 : i32
    return %c0_i32, %c0_i32_0 : i32, i32
  }
  func.func @transform_3(%arg0: i32) -> (i32, i32) {
    %c0_i32 = arith.constant 0 : i32
    %c0_i32_0 = arith.constant 0 : i32
    %c0_i32_1 = arith.constant 0 : i32
    return %c0_i32, %c0_i32_0 : i32, i32
  }
  func.func @transform_4(%arg0: i32) -> (i32, i32) {
    %c0_i32 = arith.constant 0 : i32
    %c0_i32_0 = arith.constant 0 : i32
    %c0_i32_1 = arith.constant 0 : i32
    return %c0_i32, %c0_i32_0 : i32, i32
  }
  func.func @transform_5(%arg0: i32) -> (i32, i32) {
    %c0_i32 = arith.constant 0 : i32
    %c0_i32_0 = arith.constant 0 : i32
    %c0_i32_1 = arith.constant 0 : i32
    return %c0_i32, %c0_i32_0 : i32, i32
  }
  func.func @transform_6(%arg0: i32) -> (i32, i32) {
    %c0_i32 = arith.constant 0 : i32
    %c0_i32_0 = arith.constant 0 : i32
    %c0_i32_1 = arith.constant 0 : i32
    return %c0_i32, %c0_i32_0 : i32, i32
  }
  func.func @transform_7(%arg0: i32) -> (i32, i32) {
    %c0_i32 = arith.constant 0 : i32
    %c0_i32_0 = arith.constant 0 : i32
    %c0_i32_1 = arith.constant 0 : i32
    return %c0_i32, %c0_i32_0 : i32, i32
  }
  func.func @transform_8(%arg0: i32) -> (i32, i32) {
    %c0_i32 = arith.constant 0 : i32
    %c0_i32_0 = arith.constant 0 : i32
    %c0_i32_1 = arith.constant 0 : i32
    return %c0_i32, %c0_i32_0 : i32, i32
  }
  func.func @transform_9(%arg0: i32) -> (i32, i32) {
    %c0_i32 = arith.constant 0 : i32
    %c0_i32_0 = arith.constant 0 : i32
    %c0_i32_1 = arith.constant 0 : i32
    return %c0_i32, %c0_i32_0 : i32, i32
  }
  func.func @transform_10(%arg0: i32) -> (i32, i32) {
    %c0_i32 = arith.constant 0 : i32
    %c0_i32_0 = arith.constant 0 : i32
    %c0_i32_1 = arith.constant 0 : i32
    return %c0_i32, %c0_i32_0 : i32, i32
  }
  func.func @transform_11(%arg0: i32) -> (i32, i32) {
    %c0_i32 = arith.constant 0 : i32
    %c0_i32_0 = arith.constant 0 : i32
    return %arg0, %c0_i32 : i32, i32
  }
}

</mosaic_0001>

<llo_original>
// kernel: tpu_custom_call.1
$region0: #{tpu_custom_call.1}
  #allocation0 [shape = 'u32[]', space=smem, size = 0x4, offset = 0x4, fixed_abs, tag = 'smem constant byte address 0x4 - core index']
  #allocation1 [shape = 'u32[144,128]{1,0:T(1,128)}', space=vmem, size = 0x12000, scoped, tag = 'internal scratch']
  %s0 = inlined_call_operand.hbm [shape: bf16[64,128], index: 0, kind: input, shape index: {}]
  %s1 = inlined_call_operand.hbm [shape: bf16[64,128], index: 1, kind: input, shape index: {}]
  %s2 = inlined_call_operand.hbm [shape: bf16[128,128], index: 2, kind: input, shape index: {}]
  %s3 = inlined_call_operand.hbm [shape: bf16[128,128], index: 3, kind: input, shape index: {}]
  %s4 = inlined_call_operand.vmem [shape: f32[1,128], index: 4, kind: input, shape index: {}]
  %s5 = inlined_call_operand.hbm [shape: bf16[128,128], index: 5, kind: input, shape index: {}]
  %s6 = inlined_call_operand.vmem [shape: f32[1,128], index: 6, kind: input, shape index: {}]
  %s7 = inlined_call_operand.hbm [shape: bf16[128,128], index: 7, kind: input, shape index: {}]
  %s8 = inlined_call_operand.vmem [shape: f32[1,128], index: 8, kind: input, shape index: {}]
  %s9 = inlined_call_operand.hbm [shape: bf16[128,128], index: 9, kind: input, shape index: {}]
  %s10 = inlined_call_operand.vmem [shape: f32[1,128], index: 10, kind: input, shape index: {}]
  %s11 = inlined_call_operand.hbm [shape: f32[64,128], index: 11, kind: output, shape index: {}]
  %s12 = sld [smem:[#allocation0]]
  $region105: #{tpu_custom_call.1} parent=0
    _
  %s14 = ssub.s32 1, %s12
  %s15 = scalar_select 0, %s14, %s12
  $region1: #{tpu_custom_call.1} parent=0
    #allocation2 [shape = 'u8[8192]{0}', space=vmem, size = 0x2000, scoped, tag = 'input window, operand 0']
    #allocation3 [shape = 's32[2]{0}', space=sflag, size = 0x8, scoped, tag = 'scoped memory for tpu_custom_call.1']
    #allocation4 [shape = 's32[2]{0}', space=sflag, size = 0x8, scoped, tag = 'scoped memory for tpu_custom_call.1']
    #allocation5 [shape = 'u8[8192]{0}', space=vmem, size = 0x2000, scoped, tag = 'input window, operand 1']
    #allocation6 [shape = 's32[2]{0}', space=sflag, size = 0x8, scoped, tag = 'scoped memory for tpu_custom_call.1']
    #allocation7 [shape = 'u8[32768]{0}', space=vmem, size = 0x8000, scoped, tag = 'input window, operand 2, single buffered']
    #allocation8 [shape = 'u8[32768]{0}', space=vmem, size = 0x8000, scoped, tag = 'input window, operand 3, single buffered']
    #allocation9 [shape = 's32[1]{0}', space=sflag, size = 0x4, scoped, tag = 'scoped memory for tpu_custom_call.1']
    #allocation10 [shape = 'u8[32768]{0}', space=vmem, size = 0x8000, scoped, tag = 'input window, operand 5, single buffered']
    #allocation11 [shape = 'u8[32768]{0}', space=vmem, size = 0x8000, scoped, tag = 'input window, operand 7, single buffered']
    #allocation12 [shape = 's32[1]{0}', space=sflag, size = 0x4, scoped, tag = 'scoped memory for tpu_custom_call.1']
    #allocation13 [shape = 'u8[32768]{0}', space=vmem, size = 0x8000, scoped, tag = 'input window, operand 9, single buffered']
    #allocation14 [shape = 'u8[16384]{0}', space=vmem, size = 0x4000, scoped, tag = 'output window, operand 0']
    %16 = vsyncpa [#allocation3], 0
    %s17 = scalar_lea.sflag [#allocation3], 1
    %18 = vsyncpa %s17, 0
    %19 = vsyncpa [#allocation6], 0
    %s20 = scalar_lea.sflag [#allocation6], 1
    %21 = vsyncpa %s20, 0
    %22 = vsyncpa [#allocation9], 0
    %23 = vsyncpa [#allocation12], 0
    %24 = vsyncpa [#allocation4], 0
    %s25 = scalar_lea.sflag [#allocation4], 1
    %26 = vsyncpa %s25, 0
    loop: start=0, step=1, limit=6
    $region2: #{tpu_custom_call.1} parent=1 // loop_pre_header
      _
    $region3: #{tpu_custom_call.1} parent=1 // loop_header
      %s28 = sphi 0, %s32
      %p29 = scmp.ge.s32.totalorder %s28, 6
      %s38 = sphi 0, %s40
      %s41 = sphi 0, %s38
      %s42 = sphi 0, %s41
      %s58 = sphi 0, %s42
      %s64 = sphi 0, %s66
      %s67 = sphi 0, %s64
      %s68 = sphi 0, %s67
      %s84 = sphi 0, %s68
      %s88 = sphi 0, %s88
      %s90 = sphi 0, %s88
      %s91 = sphi 0, %s90
      %s105 = sphi 0, %s91
      %s109 = sphi 0, %s109
      %s111 = sphi 0, %s109
      %s112 = sphi 0, %s111
      %s126 = sphi 0, %s112
      %s130 = sphi 0, %s130
      %s132 = sphi 0, %s130
      %s133 = sphi 0, %s132
      %s147 = sphi 0, %s133
      %s151 = sphi 0, %s151
      %s153 = sphi 0, %s151
      %s154 = sphi 0, %s153
      %s168 = sphi 0, %s154
      %s172 = sphi 0, %s172
      %s174 = sphi 0, %s172
      %s175 = sphi 0, %s174
      %s189 = sphi 0, %s175
      %s193 = sphi 0, %s193
      %s195 = sphi 0, %s193
      %s196 = sphi 0, %s195
      %s210 = sphi 0, %s196
      %s214 = sphi 0, %s214
      %s216 = sphi 0, %s214
      %s217 = sphi 0, %s216
      %s231 = sphi 0, %s217
      %s235 = sphi 0, %s235
      %s237 = sphi 0, %s235
      %s238 = sphi 0, %s237
      %s252 = sphi 0, %s238
      %s256 = sphi 0, %s256
      %s258 = sphi 0, %s256
      %s259 = sphi 0, %s258
      %s273 = sphi 0, %s259
      %s279 = sphi 0, %s281
      %s282 = sphi 0, %s279
      %s283 = sphi 0, %s282
      %s299 = sphi 0, %s283
    $region4: #{tpu_custom_call.1} parent=1 // loop_header_branch
      %31 = sbr.rel (%p29) target = $region8
    $region5: #{tpu_custom_call.1} parent=1 // loop_body
      %s33 = ssub.s32 %s28, 1
      %s34 = ssub.s32 %s28, 2
      %s35 = sadd.s32 %s28, 1
      %s36 = ssub.s32 %s28, %s35
      %p37 = scmp.eq.s32.totalorder %s36, 0
      %s39 = sadd.s32 %s38, 1
      %s40 = scalar_select %p37, %s38, %s39
      %p43 = pneg %p37
      %p44 = scmp.eq.s32.totalorder %s28, 3
      %p45 = por %p43, %p44
      %p46 = scmp.ne.s32.totalorder %s38, %s41
      %p47 = scmp.eq.s32.totalorder %s28, 0
      %p48 = por %p46, %p47
      %p49 = scmp.ne.s32.totalorder %s38, %s41
      %p50 = scmp.eq.s32.totalorder %s33, 3
      %p51 = por %p49, %p50
      %p52 = scmp.ne.s32.totalorder %s41, %s42
      %p53 = scmp.eq.s32.totalorder %s33, 0
      %p54 = por %p52, %p53
      %p55 = scmp.ne.s32.totalorder %s41, %s42
      %p56 = scmp.eq.s32.totalorder %s34, 3
      %p57 = por %p55, %p56
      %p59 = scmp.ne.s32.totalorder %s42, %s58
      %p60 = scmp.eq.s32.totalorder %s34, 0
      %p61 = por %p59, %p60
      %s62 = ssub.s32 %s28, %s35
      %p63 = scmp.eq.s32.totalorder %s62, 0
      %s65 = sadd.s32 %s64, 1
      %s66 = scalar_select %p63, %s64, %s65
      %p69 = pneg %p63
      %p70 = scmp.eq.s32.totalorder %s28, 3
      %p71 = por %p69, %p70
      %p72 = scmp.ne.s32.totalorder %s64, %s67
      %p73 = scmp.eq.s32.totalorder %s28, 0
      %p74 = por %p72, %p73
      %p75 = scmp.ne.s32.totalorder %s64, %s67
      %p76 = scmp.eq.s32.totalorder %s33, 3
      %p77 = por %p75, %p76
      %p78 = scmp.ne.s32.totalorder %s67, %s68
      %p79 = scmp.eq.s32.totalorder %s33, 0
      %p80 = por %p78, %p79
      %p81 = scmp.ne.s32.totalorder %s67, %s68
      %p82 = scmp.eq.s32.totalorder %s34, 3
      %p83 = por %p81, %p82
      %p85 = scmp.ne.s32.totalorder %s68, %s84
      %p86 = scmp.eq.s32.totalorder %s34, 0
      %p87 = por %p85, %p86
      %s89 = sadd.s32 %s88, 1
      %p92 = scmp.eq.s32.totalorder %s28, 3
      %p93 = scmp.ne.s32.totalorder %s88, %s90
      %p94 = scmp.eq.s32.totalorder %s28, 0
      %p95 = por %p93, %p94
      %p96 = scmp.ne.s32.totalorder %s88, %s90
      %p97 = scmp.eq.s32.totalorder %s33, 3
      %p98 = por %p96, %p97
      %p99 = scmp.ne.s32.totalorder %s90, %s91
      %p100 = scmp.eq.s32.totalorder %s33, 0
      %p101 = por %p99, %p100
      %p102 = scmp.ne.s32.totalorder %s90, %s91
      %p103 = scmp.eq.s32.totalorder %s34, 3
      %p104 = por %p102, %p103
      %p106 = scmp.ne.s32.totalorder %s91, %s105
      %p107 = scmp.eq.s32.totalorder %s34, 0
      %p108 = por %p106, %p107
      %s110 = sadd.s32 %s109, 1
      %p113 = scmp.eq.s32.totalorder %s28, 3
      %p114 = scmp.ne.s32.totalorder %s109, %s111
      %p115 = scmp.eq.s32.totalorder %s28, 0
      %p116 = por %p114, %p115
      %p117 = scmp.ne.s32.totalorder %s109, %s111
      %p118 = scmp.eq.s32.totalorder %s33, 3
      %p119 = por %p117, %p118
      %p120 = scmp.ne.s32.totalorder %s111, %s112
      %p121 = scmp.eq.s32.totalorder %s33, 0
      %p122 = por %p120, %p121
      %p123 = scmp.ne.s32.totalorder %s111, %s112
      %p124 = scmp.eq.s32.totalorder %s34, 3
      %p125 = por %p123, %p124
      %p127 = scmp.ne.s32.totalorder %s112, %s126
      %p128 = scmp.eq.s32.totalorder %s34, 0
      %p129 = por %p127, %p128
      %s131 = sadd.s32 %s130, 1
      %p134 = scmp.eq.s32.totalorder %s28, 3
      %p135 = scmp.ne.s32.totalorder %s130, %s132
      %p136 = scmp.eq.s32.totalorder %s28, 0
      %p137 = por %p135, %p136
      %p138 = scmp.ne.s32.totalorder %s130, %s132
      %p139 = scmp.eq.s32.totalorder %s33, 3
      %p140 = por %p138, %p139
      %p141 = scmp.ne.s32.totalorder %s132, %s133
      %p142 = scmp.eq.s32.totalorder %s33, 0
      %p143 = por %p141, %p142
      %p144 = scmp.ne.s32.totalorder %s132, %s133
      %p145 = scmp.eq.s32.totalorder %s34, 3
      %p146 = por %p144, %p145
      %p148 = scmp.ne.s32.totalorder %s133, %s147
      %p149 = scmp.eq.s32.totalorder %s34, 0
      %p150 = por %p148, %p149
      %s152 = sadd.s32 %s151, 1
      %p155 = scmp.eq.s32.totalorder %s28, 3
      %p156 = scmp.ne.s32.totalorder %s151, %s153
      %p157 = scmp.eq.s32.totalorder %s28, 0
      %p158 = por %p156, %p157
      %p159 = scmp.ne.s32.totalorder %s151, %s153
      %p160 = scmp.eq.s32.totalorder %s33, 3
      %p161 = por %p159, %p160
      %p162 = scmp.ne.s32.totalorder %s153, %s154
      %p163 = scmp.eq.s32.totalorder %s33, 0
      %p164 = por %p162, %p163
      %p165 = scmp.ne.s32.totalorder %s153, %s154
      %p166 = scmp.eq.s32.totalorder %s34, 3
      %p167 = por %p165, %p166
      %p169 = scmp.ne.s32.totalorder %s154, %s168
      %p170 = scmp.eq.s32.totalorder %s34, 0
      %p171 = por %p169, %p170
      %s173 = sadd.s32 %s172, 1
      %p176 = scmp.eq.s32.totalorder %s28, 3
      %p177 = scmp.ne.s32.totalorder %s172, %s174
      %p178 = scmp.eq.s32.totalorder %s28, 0
      %p179 = por %p177, %p178
      %p180 = scmp.ne.s32.totalorder %s172, %s174
      %p181 = scmp.eq.s32.totalorder %s33, 3
      %p182 = por %p180, %p181
      %p183 = scmp.ne.s32.totalorder %s174, %s175
      %p184 = scmp.eq.s32.totalorder %s33, 0
      %p185 = por %p183, %p184
      %p186 = scmp.ne.s32.totalorder %s174, %s175
      %p187 = scmp.eq.s32.totalorder %s34, 3
      %p188 = por %p186, %p187
      %p190 = scmp.ne.s32.totalorder %s175, %s189
      %p191 = scmp.eq.s32.totalorder %s34, 0
      %p192 = por %p190, %p191
      %s194 = sadd.s32 %s193, 1
      %p197 = scmp.eq.s32.totalorder %s28, 3
      %p198 = scmp.ne.s32.totalorder %s193, %s195
      %p199 = scmp.eq.s32.totalorder %s28, 0
      %p200 = por %p198, %p199
      %p201 = scmp.ne.s32.totalorder %s193, %s195
      %p202 = scmp.eq.s32.totalorder %s33, 3
      %p203 = por %p201, %p202
      %p204 = scmp.ne.s32.totalorder %s195, %s196
      %p205 = scmp.eq.s32.totalorder %s33, 0
      %p206 = por %p204, %p205
      %p207 = scmp.ne.s32.totalorder %s195, %s196
      %p208 = scmp.eq.s32.totalorder %s34, 3
      %p209 = por %p207, %p208
      %p211 = scmp.ne.s32.totalorder %s196, %s210
      %p212 = scmp.eq.s32.totalorder %s34, 0
      %p213 = por %p211, %p212
      %s215 = sadd.s32 %s214, 1
      %p218 = scmp.eq.s32.totalorder %s28, 3
      %p219 = scmp.ne.s32.totalorder %s214, %s216
      %p220 = scmp.eq.s32.totalorder %s28, 0
      %p221 = por %p219, %p220
      %p222 = scmp.ne.s32.totalorder %s214, %s216
      %p223 = scmp.eq.s32.totalorder %s33, 3
      %p224 = por %p222, %p223
      %p225 = scmp.ne.s32.totalorder %s216, %s217
      %p226 = scmp.eq.s32.totalorder %s33, 0
      %p227 = por %p225, %p226
      %p228 = scmp.ne.s32.totalorder %s216, %s217
      %p229 = scmp.eq.s32.totalorder %s34, 3
      %p230 = por %p228, %p229
      %p232 = scmp.ne.s32.totalorder %s217, %s231
      %p233 = scmp.eq.s32.totalorder %s34, 0
      %p234 = por %p232, %p233
      %s236 = sadd.s32 %s235, 1
      %p239 = scmp.eq.s32.totalorder %s28, 3
      %p240 = scmp.ne.s32.totalorder %s235, %s237
      %p241 = scmp.eq.s32.totalorder %s28, 0
      %p242 = por %p240, %p241
      %p243 = scmp.ne.s32.totalorder %s235, %s237
      %p244 = scmp.eq.s32.totalorder %s33, 3
      %p245 = por %p243, %p244
      %p246 = scmp.ne.s32.totalorder %s237, %s238
      %p247 = scmp.eq.s32.totalorder %s33, 0
      %p248 = por %p246, %p247
      %p249 = scmp.ne.s32.totalorder %s237, %s238
      %p250 = scmp.eq.s32.totalorder %s34, 3
      %p251 = por %p249, %p250
      %p253 = scmp.ne.s32.totalorder %s238, %s252
      %p254 = scmp.eq.s32.totalorder %s34, 0
      %p255 = por %p253, %p254
      %s257 = sadd.s32 %s256, 1
      %p260 = scmp.eq.s32.totalorder %s28, 3
      %p261 = scmp.ne.s32.totalorder %s256, %s258
      %p262 = scmp.eq.s32.totalorder %s28, 0
      %p263 = por %p261, %p262
      %p264 = scmp.ne.s32.totalorder %s256, %s258
      %p265 = scmp.eq.s32.totalorder %s33, 3
      %p266 = por %p264, %p265
      %p267 = scmp.ne.s32.totalorder %s258, %s259
      %p268 = scmp.eq.s32.totalorder %s33, 0
      %p269 = por %p267, %p268
      %p270 = scmp.ne.s32.totalorder %s258, %s259
      %p271 = scmp.eq.s32.totalorder %s34, 3
      %p272 = por %p270, %p271
      %p274 = scmp.ne.s32.totalorder %s259, %s273
      %p275 = scmp.eq.s32.totalorder %s34, 0
      %p276 = por %p274, %p275
      %s277 = ssub.s32 %s28, %s35
      %p278 = scmp.eq.s32.totalorder %s277, 0
      %s280 = sadd.s32 %s279, 1
      %s281 = scalar_select %p278, %s279, %s280
      %p284 = pneg %p278
      %p285 = scmp.eq.s32.totalorder %s28, 3
      %p286 = por %p284, %p285
      %p287 = scmp.ne.s32.totalorder %s279, %s282
      %p288 = scmp.eq.s32.totalorder %s28, 0
      %p289 = por %p287, %p288
      %p290 = scmp.ne.s32.totalorder %s279, %s282
      %p291 = scmp.eq.s32.totalorder %s33, 3
      %p292 = por %p290, %p291
      %p293 = scmp.ne.s32.totalorder %s282, %s283
      %p294 = scmp.eq.s32.totalorder %s33, 0
      %p295 = por %p293, %p294
      %p296 = scmp.ne.s32.totalorder %s282, %s283
      %p297 = scmp.eq.s32.totalorder %s34, 3
      %p298 = por %p296, %p297
      %p300 = scmp.ne.s32.totalorder %s283, %s299
      %p301 = scmp.eq.s32.totalorder %s34, 0
      %p302 = por %p300, %p301
      %p303 = scmp.le.s32.totalorder 1, %s28
      %p304 = scmp.lt.s32.totalorder %s28, 5
      %p305 = pnand %p303, %p304
      %p306 = pneg %p305
      // Predicated region
      $region9: #{tpu_custom_call.1} parent=5 // pred_check
        _
      $region10: #{tpu_custom_call.1} parent=5 // pred_check_branch
        %308 = sbr.rel (%p305) target = $region12
      $region11: #{tpu_custom_call.1} parent=5 // pred_region
        %s309 = ssub.s32 %s28, 1
        // Predicated region
        $region13: #{tpu_custom_call.1} parent=11 // pred_check
          %p310 = pneg %p101
        $region14: #{tpu_custom_call.1} parent=11 // pred_check_branch
          %312 = sbr.rel (%p310) target = $region16
        $region15: #{tpu_custom_call.1} parent=11 // pred_region
          %s314 = ssub.s32 1024, 1024
          %315 = vsyncadd [#allocation6], %s314
          %s316 = sshll.u32 [#allocation7], 4
          %s317 = int_to_ptr.vmem [resolvable:$true] %s316
          %322 = dma.hbm_to_vmem [thread:$0]  %s2, 1024, %s317, [#allocation6], 64, 64, 4
        $region16: #{tpu_custom_call.1} parent=11 // pred_fallthru
          _
        // Predicated region
        $region17: #{tpu_custom_call.1} parent=11 // pred_check
          %p323 = pneg %p122
        $region18: #{tpu_custom_call.1} parent=11 // pred_check_branch
          %325 = sbr.rel (%p323) target = $region20
        $region19: #{tpu_custom_call.1} parent=11 // pred_region
          %s327 = ssub.s32 1024, 1024
          %328 = vsyncadd [#allocation9], %s327
          %s329 = sshll.u32 [#allocation8], 4
          %s330 = int_to_ptr.vmem [resolvable:$true] %s329
          %335 = dma.hbm_to_vmem [thread:$0]  %s3, 1024, %s330, [#allocation9], 64, 64, 4
        $region20: #{tpu_custom_call.1} parent=11 // pred_fallthru
          _
        // Predicated region
        $region21: #{tpu_custom_call.1} parent=11 // pred_check
          %p336 = pneg %p143
        $region22: #{tpu_custom_call.1} parent=11 // pred_check_branch
          %338 = sbr.rel (%p336) target = $region24
        $region23: #{tpu_custom_call.1} parent=11 // pred_region
          _
        $region24: #{tpu_custom_call.1} parent=11 // pred_fallthru
          _
        // Predicated region
        $region25: #{tpu_custom_call.1} parent=11 // pred_check
          %p339 = pneg %p164
        $region26: #{tpu_custom_call.1} parent=11 // pred_check_branch
          %341 = sbr.rel (%p339) target = $region28
        $region27: #{tpu_custom_call.1} parent=11 // pred_region
          %s343 = ssub.s32 1024, 1024
          %344 = vsyncadd [#allocation9], %s343
          %s345 = sshll.u32 [#allocation10], 4
          %s346 = int_to_ptr.vmem [resolvable:$true] %s345
          %351 = dma.hbm_to_vmem [thread:$0]  %s5, 1024, %s346, [#allocation9], 64, 64, 4
        $region28: #{tpu_custom_call.1} parent=11 // pred_fallthru
          _
        // Predicated region
        $region29: #{tpu_custom_call.1} parent=11 // pred_check
          %p352 = pneg %p185
        $region30: #{tpu_custom_call.1} parent=11 // pred_check_branch
          %354 = sbr.rel (%p352) target = $region32
        $region31: #{tpu_custom_call.1} parent=11 // pred_region
          _
        $region32: #{tpu_custom_call.1} parent=11 // pred_fallthru
          _
        // Predicated region
        $region33: #{tpu_custom_call.1} parent=11 // pred_check
          %p355 = pneg %p206
        $region34: #{tpu_custom_call.1} parent=11 // pred_check_branch
          %357 = sbr.rel (%p355) target = $region36
        $region35: #{tpu_custom_call.1} parent=11 // pred_region
          %s359 = ssub.s32 1024, 1024
          %360 = vsyncadd [#allocation12], %s359
          %s361 = sshll.u32 [#allocation11], 4
          %s362 = int_to_ptr.vmem [resolvable:$true] %s361
          %367 = dma.hbm_to_vmem [thread:$0]  %s7, 1024, %s362, [#allocation12], 64, 64, 4
        $region36: #{tpu_custom_call.1} parent=11 // pred_fallthru
          _
        // Predicated region
        $region37: #{tpu_custom_call.1} parent=11 // pred_check
          %p368 = pneg %p227
        $region38: #{tpu_custom_call.1} parent=11 // pred_check_branch
          %370 = sbr.rel (%p368) target = $region40
        $region39: #{tpu_custom_call.1} parent=11 // pred_region
          _
        $region40: #{tpu_custom_call.1} parent=11 // pred_fallthru
          _
        // Predicated region
        $region41: #{tpu_custom_call.1} parent=11 // pred_check
          %p371 = pneg %p248
        $region42: #{tpu_custom_call.1} parent=11 // pred_check_branch
          %373 = sbr.rel (%p371) target = $region44
        $region43: #{tpu_custom_call.1} parent=11 // pred_region
          %s375 = ssub.s32 1024, 1024
          %376 = vsyncadd [#allocation12], %s375
          %s377 = sshll.u32 [#allocation13], 4
          %s378 = int_to_ptr.vmem [resolvable:$true] %s377
          %383 = dma.hbm_to_vmem [thread:$0]  %s9, 1024, %s378, [#allocation12], 64, 64, 4
        $region44: #{tpu_custom_call.1} parent=11 // pred_fallthru
          _
        // Predicated region
        $region45: #{tpu_custom_call.1} parent=11 // pred_check
          %p384 = pneg %p269
        $region46: #{tpu_custom_call.1} parent=11 // pred_check_branch
          %386 = sbr.rel (%p384) target = $region48
        $region47: #{tpu_custom_call.1} parent=11 // pred_region
          _
        $region48: #{tpu_custom_call.1} parent=11 // pred_fallthru
          _
      $region12: #{tpu_custom_call.1} parent=5 // pred_fallthru
        _
      %p387 = scmp.lt.s32.totalorder %s28, 4
      // Predicated region
      $region49: #{tpu_custom_call.1} parent=5 // pred_check
        %p388 = pneg %p387
      $region50: #{tpu_custom_call.1} parent=5 // pred_check_branch
        %390 = sbr.rel (%p388) target = $region52
      $region51: #{tpu_custom_call.1} parent=5 // pred_region
        // Predicated region
        $region53: #{tpu_custom_call.1} parent=51 // pred_check
          %p391 = pneg %p48
        $region54: #{tpu_custom_call.1} parent=51 // pred_check_branch
          %393 = sbr.rel (%p391) target = $region56
        $region55: #{tpu_custom_call.1} parent=51 // pred_region
          %s394 = sand.u32 %s38, 1
          %s395 = scalar_lea.sflag [#allocation3], %s394
          %s396 = sand.u32 %s38, 1
          %s397 = smul.addr %s396, 8
          %s398 = scalar_lea.vmem [#allocation2], %s397
          %s399 = smul.u32 2, %s28
          %s401 = ssub.s32 128, 128
          %402 = vsyncadd %s395, %s401
          %s403 = smul.addr %s399, 64
          %s404 = scalar_lea.hbm %s0, %s403
          %s405 = sshll.u32 %s398, 4
          %s406 = int_to_ptr.vmem [resolvable:$true] %s405
          %411 = dma.hbm_to_vmem [thread:$0]  %s404, 128, %s406, %s395, 64, 64, 4
        $region56: #{tpu_custom_call.1} parent=51 // pred_fallthru
          _
        // Predicated region
        $region57: #{tpu_custom_call.1} parent=51 // pred_check
          %p412 = pneg %p74
        $region58: #{tpu_custom_call.1} parent=51 // pred_check_branch
          %414 = sbr.rel (%p412) target = $region60
        $region59: #{tpu_custom_call.1} parent=51 // pred_region
          %s415 = sand.u32 %s28, 1
          %s416 = scalar_lea.sflag [#allocation6], %s415
          %s417 = sand.u32 %s64, 1
          %s418 = smul.addr %s417, 8
          %s419 = scalar_lea.vmem [#allocation5], %s418
          %s420 = smul.u32 2, %s28
          %s422 = ssub.s32 128, 128
          %423 = vsyncadd %s416, %s422
          %s424 = smul.addr %s420, 64
          %s425 = scalar_lea.hbm %s1, %s424
          %s426 = sshll.u32 %s419, 4
          %s427 = int_to_ptr.vmem [resolvable:$true] %s426
          %432 = dma.hbm_to_vmem [thread:$0]  %s425, 128, %s427, %s416, 64, 64, 4
        $region60: #{tpu_custom_call.1} parent=51 // pred_fallthru
          _
      $region52: #{tpu_custom_call.1} parent=5 // pred_fallthru
        _
      %p433 = scmp.le.s32.totalorder 1, %s28
      %p434 = scmp.lt.s32.totalorder %s28, 5
      %p435 = pnand %p433, %p434
      %p436 = pneg %p435
      // Predicated region
      $region61: #{tpu_custom_call.1} parent=5 // pred_check
        _
      $region62: #{tpu_custom_call.1} parent=5 // pred_check_branch
        %438 = sbr.rel (%p435) target = $region64
      $region63: #{tpu_custom_call.1} parent=5 // pred_region
        %s439 = ssub.s32 %s28, 1
        %s440 = sand.u32 %s41, 1
        %s441 = scalar_lea.sflag [#allocation3], %s440
        %s442 = sand.u32 %s41, 1
        %s443 = smul.addr %s442, 8
        %s444 = scalar_lea.vmem [#allocation2], %s443
        // Predicated region
        $region65: #{tpu_custom_call.1} parent=63 // pred_check
          %p445 = pneg %p54
        $region66: #{tpu_custom_call.1} parent=63 // pred_check_branch
          %447 = sbr.rel (%p445) target = $region68
        $region67: #{tpu_custom_call.1} parent=63 // pred_region
          %448 = dma.done %s441, 128
        $region68: #{tpu_custom_call.1} parent=63 // pred_fallthru
          _
        %s449 = sand.u32 %s33, 1
        %s450 = scalar_lea.sflag [#allocation6], %s449
        %s451 = sand.u32 %s67, 1
        %s452 = smul.addr %s451, 8
        %s453 = scalar_lea.vmem [#allocation5], %s452
        // Predicated region
        $region69: #{tpu_custom_call.1} parent=63 // pred_check
          %p454 = pneg %p80
        $region70: #{tpu_custom_call.1} parent=63 // pred_check_branch
          %456 = sbr.rel (%p454) target = $region72
        $region71: #{tpu_custom_call.1} parent=63 // pred_region
          %457 = dma.done %s450, 128
        $region72: #{tpu_custom_call.1} parent=63 // pred_fallthru
          _
        // Predicated region
        $region73: #{tpu_custom_call.1} parent=63 // pred_check
          %p458 = pneg %p101
        $region74: #{tpu_custom_call.1} parent=63 // pred_check_branch
          %460 = sbr.rel (%p458) target = $region76
        $region75: #{tpu_custom_call.1} parent=63 // pred_region
          %461 = dma.done [#allocation6], 1024
        $region76: #{tpu_custom_call.1} parent=63 // pred_fallthru
          _
        // Predicated region
        $region77: #{tpu_custom_call.1} parent=63 // pred_check
          %p462 = pneg %p122
        $region78: #{tpu_custom_call.1} parent=63 // pred_check_branch
          %464 = sbr.rel (%p462) target = $region80
        $region79: #{tpu_custom_call.1} parent=63 // pred_region
          %465 = dma.done [#allocation9], 1024
        $region80: #{tpu_custom_call.1} parent=63 // pred_fallthru
          _
        // Predicated region
        $region81: #{tpu_custom_call.1} parent=63 // pred_check
          %p466 = pneg %p164
        $region82: #{tpu_custom_call.1} parent=63 // pred_check_branch
          %468 = sbr.rel (%p466) target = $region84
        $region83: #{tpu_custom_call.1} parent=63 // pred_region
          %469 = dma.done [#allocation9], 1024
        $region84: #{tpu_custom_call.1} parent=63 // pred_fallthru
          _
        // Predicated region
        $region85: #{tpu_custom_call.1} parent=63 // pred_check
          %p470 = pneg %p206
        $region86: #{tpu_custom_call.1} parent=63 // pred_check_branch
          %472 = sbr.rel (%p470) target = $region88
        $region87: #{tpu_custom_call.1} parent=63 // pred_region
          %473 = dma.done [#allocation12], 1024
        $region88: #{tpu_custom_call.1} parent=63 // pred_fallthru
          _
        // Predicated region
        $region89: #{tpu_custom_call.1} parent=63 // pred_check
          %p474 = pneg %p248
        $region90: #{tpu_custom_call.1} parent=63 // pred_check_branch
          %476 = sbr.rel (%p474) target = $region92
        $region91: #{tpu_custom_call.1} parent=63 // pred_region
          %477 = dma.done [#allocation12], 1024
        $region92: #{tpu_custom_call.1} parent=63 // pred_fallthru
          _
        %s478 = sand.u32 %s41, 1
        %s479 = scalar_lea.sflag [#allocation3], %s478
        %s480 = sand.u32 %s41, 1
        %s481 = smul.addr %s480, 8
        %s482 = scalar_lea.vmem [#allocation2], %s481
        %p483 = pneg %p54
        %p484 = pneg %p51
        %s485 = sand.u32 %s33, 1
        %s486 = scalar_lea.sflag [#allocation6], %s485
        %s487 = sand.u32 %s67, 1
        %s488 = smul.addr %s487, 8
        %s489 = scalar_lea.vmem [#allocation5], %s488
        %p490 = pneg %p80
        %p491 = pneg %p77
        %p492 = pneg %p101
        %p493 = pneg %p98
        %p494 = pneg %p122
        %p495 = pneg %p119
        %p496 = pneg %p143
        %p497 = pneg %p140
        %p498 = pneg %p164
        %p499 = pneg %p161
        %p500 = pneg %p185
        %p501 = pneg %p182
        %p502 = pneg %p206
        %p503 = pneg %p203
        %p504 = pneg %p227
        %p505 = pneg %p224
        %p506 = pneg %p248
        %p507 = pneg %p245
        %p508 = pneg %p269
        %p509 = pneg %p266
        %p510 = pneg %p295
        %p511 = pneg %p292
        %s512 = sand.u32 %s282, 1
        %s513 = scalar_lea.sflag [#allocation4], %s512
        %s514 = sand.u32 %s282, 1
        %s515 = smul.addr %s514, 16
        %s516 = scalar_lea.vmem [#allocation14], %s515
        %s517 = smul.u32 2, %s33
        %s518 = smul.u32 2, %s33
        %s519 = smul.u32 2, %s33
        %v521 = vld [vmem:[%s453] sm:$0xf]
        %v522 = vld [vmem:[%s453 + $0x4] sm:$0xf]
        %v523 = vld [vmem:[#allocation8] sm:$0xf]
        %v524 = vld [vmem:[#allocation8 + $0x4] sm:$0xf]
        %v525 = vld [vmem:[#allocation8 + $0x8] sm:$0xf]
        %v526 = vld [vmem:[#allocation8 + $0xc] sm:$0xf]
        %v527 = vld [vmem:[#allocation8 + $0x10] sm:$0xf]
        %v528 = vld [vmem:[#allocation8 + $0x14] sm:$0xf]
        %v529 = vld [vmem:[#allocation8 + $0x18] sm:$0xf]
        %v530 = vld [vmem:[#allocation8 + $0x1c] sm:$0xf]
        %v531 = vld [vmem:[#allocation8 + $0x20] sm:$0xf]
        %v532 = vld [vmem:[#allocation8 + $0x24] sm:$0xf]
        %v533 = vld [vmem:[#allocation8 + $0x28] sm:$0xf]
        %v534 = vld [vmem:[#allocation8 + $0x2c] sm:$0xf]
        %v535 = vld [vmem:[#allocation8 + $0x30] sm:$0xf]
        %v536 = vld [vmem:[#allocation8 + $0x34] sm:$0xf]
        %v537 = vld [vmem:[#allocation8 + $0x38] sm:$0xf]
        %v538 = vld [vmem:[#allocation8 + $0x3c] sm:$0xf]
        %v539 = vld [vmem:[%s444] sm:$0xf]
        %v540 = vld [vmem:[%s444 + $0x4] sm:$0xf]
        %v541 = vld [vmem:[#allocation7] sm:$0xf]
        %v542 = vld [vmem:[#allocation7 + $0x4] sm:$0xf]
        %v543 = vld [vmem:[#allocation7 + $0x8] sm:$0xf]
        %v544 = vld [vmem:[#allocation7 + $0xc] sm:$0xf]
        %v545 = vld [vmem:[#allocation7 + $0x10] sm:$0xf]
        %v546 = vld [vmem:[#allocation7 + $0x14] sm:$0xf]
        %v547 = vld [vmem:[#allocation7 + $0x18] sm:$0xf]
        %v548 = vld [vmem:[#allocation7 + $0x1c] sm:$0xf]
        %v549 = vld [vmem:[#allocation7 + $0x20] sm:$0xf]
        %v550 = vld [vmem:[#allocation7 + $0x24] sm:$0xf]
        %v551 = vld [vmem:[#allocation7 + $0x28] sm:$0xf]
        %v552 = vld [vmem:[#allocation7 + $0x2c] sm:$0xf]
        %v553 = vld [vmem:[#allocation7 + $0x30] sm:$0xf]
        %v554 = vld [vmem:[#allocation7 + $0x34] sm:$0xf]
        %v555 = vld [vmem:[#allocation7 + $0x38] sm:$0xf]
        %v556 = vld [vmem:[#allocation7 + $0x3c] sm:$0xf]
        %v559 = vunpack.c.l.b16 %v539
        %v560 = vunpack.c.l.b16 %v540
        %v561 = vpack.c.b16 %v560, %v559
        %v579 = vunpack.c.l.b16 %v541
        %v580 = vunpack.c.l.b16 %v542
        %v581 = vunpack.c.l.b16 %v543
        %v582 = vunpack.c.l.b16 %v544
        %v583 = vunpack.c.l.b16 %v545
        %v584 = vunpack.c.l.b16 %v546
        %v585 = vunpack.c.l.b16 %v547
        %v586 = vunpack.c.l.b16 %v548
        %v587 = vunpack.c.l.b16 %v549
        %v588 = vunpack.c.l.b16 %v550
        %v589 = vunpack.c.l.b16 %v551
        %v590 = vunpack.c.l.b16 %v552
        %v591 = vunpack.c.l.b16 %v553
        %v592 = vunpack.c.l.b16 %v554
        %v593 = vunpack.c.l.b16 %v555
        %v594 = vunpack.c.l.b16 %v556
        %v595 = vpack.c.b16 %v580, %v579
        %v596 = vpack.c.b16 %v582, %v581
        %v597 = vpack.c.b16 %v584, %v583
        %v598 = vpack.c.b16 %v586, %v585
        %v599 = vpack.c.b16 %v588, %v587
        %v600 = vpack.c.b16 %v590, %v589
        %v601 = vpack.c.b16 %v592, %v591
        %v602 = vpack.c.b16 %v594, %v593
        %611 = vmatprep.subr.bf16.mxu0 0
        %612 = vmatpush1.bf16.msra.mxu0 %v595
        %613 = vmatprep.subr.bf16.mxu0 0
        %614 = vmatpush1.bf16.msra.mxu0 %v596
        %615 = vmatprep.subr.bf16.mxu0 0
        %616 = vmatpush1.bf16.msra.mxu0 %v597
        %617 = vmatprep.subr.bf16.mxu0 0
        %618 = vmatpush1.bf16.msra.mxu0 %v598
        %619 = vmatprep.subr.bf16.mxu0 0
        %620 = vmatpush1.bf16.msra.mxu0 %v599
        %621 = vmatprep.subr.bf16.mxu0 0
        %622 = vmatpush1.bf16.msra.mxu0 %v600
        %623 = vmatprep.subr.bf16.mxu0 0
        %624 = vmatpush1.bf16.msra.mxu0 %v601
        %625 = vmatprep.subr.bf16.mxu0 0
        %626 = vmatpush1.bf16.msra.mxu0 %v602
        %627 = vmatprep.subr.bf16.mxu0 0
        %628 = vmatpush1.bf16.msra.mxu0 0
        %629 = vmatprep.subr.bf16.mxu0 0
        %630 = vmatpush1.bf16.msra.mxu0 0
        %631 = vmatprep.subr.bf16.mxu0 0
        %632 = vmatpush1.bf16.msra.mxu0 0
        %633 = vmatprep.subr.bf16.mxu0 0
        %634 = vmatpush1.bf16.msra.mxu0 0
        %635 = vmatprep.subr.bf16.mxu0 0
        %636 = vmatpush1.bf16.msra.mxu0 0
        %637 = vmatprep.subr.bf16.mxu0 0
        %638 = vmatpush1.bf16.msra.mxu0 0
        %639 = vmatprep.subr.bf16.mxu0 0
        %640 = vmatpush1.bf16.msra.mxu0 0
        %641 = vmatprep.subr.bf16.mxu0 0
        %642 = vmatpush1.bf16.msra.mxu0 0
        %643 = vmatprep.mubr.bf16.mxu0 0
        %644 = vmatmul.mubr.bf16.gmra.mrb[0].mxu0 %v561
        %v645 = vpop.f32.mrb[0].mxu0
        %v646 = vadd.f32 0.0, %v645
        %v647 = vpop.f32.mrb[0].mxu0
        %v648 = vpop.f32.mrb[0].mxu0
        %v649 = vadd.f32 0.0, %v648
        %v650 = vpop.f32.mrb[0].mxu0
        %651 = vdwg.mxu0
        %v654 = vunpack.c.l.b16 %v521
        %v655 = vunpack.c.l.b16 %v522
        %v656 = vpack.c.b16 %v655, %v654
        %v674 = vunpack.c.l.b16 %v523
        %v675 = vunpack.c.l.b16 %v524
        %v676 = vunpack.c.l.b16 %v525
        %v677 = vunpack.c.l.b16 %v526
        %v678 = vunpack.c.l.b16 %v527
        %v679 = vunpack.c.l.b16 %v528
        %v680 = vunpack.c.l.b16 %v529
        %v681 = vunpack.c.l.b16 %v530
        %v682 = vunpack.c.l.b16 %v531
        %v683 = vunpack.c.l.b16 %v532
        %v684 = vunpack.c.l.b16 %v533
        %v685 = vunpack.c.l.b16 %v534
        %v686 = vunpack.c.l.b16 %v535
        %v687 = vunpack.c.l.b16 %v536
        %v688 = vunpack.c.l.b16 %v537
        %v689 = vunpack.c.l.b16 %v538
        %v690 = vpack.c.b16 %v675, %v674
        %v691 = vpack.c.b16 %v677, %v676
        %v692 = vpack.c.b16 %v679, %v678
        %v693 = vpack.c.b16 %v681, %v680
        %v694 = vpack.c.b16 %v683, %v682
        %v695 = vpack.c.b16 %v685, %v684
        %v696 = vpack.c.b16 %v687, %v686
        %v697 = vpack.c.b16 %v689, %v688
        %706 = vmatprep.subr.bf16.mxu0 0
        %707 = vmatpush1.bf16.msra.mxu0 %v690
        %708 = vmatprep.subr.bf16.mxu0 0
        %709 = vmatpush1.bf16.msra.mxu0 %v691
        %710 = vmatprep.subr.bf16.mxu0 0
        %711 = vmatpush1.bf16.msra.mxu0 %v692
        %712 = vmatprep.subr.bf16.mxu0 0
        %713 = vmatpush1.bf16.msra.mxu0 %v693
        %714 = vmatprep.subr.bf16.mxu0 0
        %715 = vmatpush1.bf16.msra.mxu0 %v694
        %716 = vmatprep.subr.bf16.mxu0 0
        %717 = vmatpush1.bf16.msra.mxu0 %v695
        %718 = vmatprep.subr.bf16.mxu0 0
        %719 = vmatpush1.bf16.msra.mxu0 %v696
        %720 = vmatprep.subr.bf16.mxu0 0
        %721 = vmatpush1.bf16.msra.mxu0 %v697
        %722 = vmatprep.subr.bf16.mxu0 0
        %723 = vmatpush1.bf16.msra.mxu0 0
        %724 = vmatprep.subr.bf16.mxu0 0
        %725 = vmatpush1.bf16.msra.mxu0 0
        %726 = vmatprep.subr.bf16.mxu0 0
        %727 = vmatpush1.bf16.msra.mxu0 0
        %728 = vmatprep.subr.bf16.mxu0 0
        %729 = vmatpush1.bf16.msra.mxu0 0
        %730 = vmatprep.subr.bf16.mxu0 0
        %731 = vmatpush1.bf16.msra.mxu0 0
        %732 = vmatprep.subr.bf16.mxu0 0
        %733 = vmatpush1.bf16.msra.mxu0 0
        %734 = vmatprep.subr.bf16.mxu0 0
        %735 = vmatpush1.bf16.msra.mxu0 0
        %736 = vmatprep.subr.bf16.mxu0 0
        %737 = vmatpush1.bf16.msra.mxu0 0
        %738 = vmatprep.mubr.bf16.mxu0 0
        %739 = vmatmul.mubr.bf16.gmra.mrb[0].mxu0 %v656
        %v740 = vpop.f32.mrb[0].mxu0
        %v741 = vadd.f32 %v646, %v740
        %v742 = vpop.f32.mrb[0].mxu0
        %v743 = vpop.f32.mrb[0].mxu0
        %v744 = vadd.f32 %v649, %v743
        %v745 = vpop.f32.mrb[0].mxu0
        %746 = vdwg.mxu0
        %v747 = vld [vmem:[%s4] sm:$0x1]
        %v749 = vlaneseq
        %v750 = vshrl.u32 %v749, 7
        %v751 = vsub.s32 0, %v750
        %v752 = vrot.slane %v747, %v751
        %v754 = vadd.f32 %v741, %v752
        %v755 = vadd.f32 %v744, %v752
        %v756 = vmul.f32 %v754, 1.442695
        %v757 = vpow.pop %v756
        %v758 = vmul.f32 %v755, 1.442695
        %v759 = vpow.pop %v758
        %v760 = vadd.f32 %v757, 1.0
        %v761 = vadd.f32 %v759, 1.0
        %v762 = vmul.f32 %v760, %v760
        %v763 = vmul.f32 %v761, %v761
        %v764 = vadd.f32 %v762, 1.0
        %v765 = vadd.f32 %v763, 1.0
        %v766 = vrcp.pop %v764
        %v767 = vrcp.pop %v765
        %v768 = vmul.f32 %v766, 2.0
        %v769 = vmul.f32 %v767, 2.0
        %v770 = vsub.f32 1.0, %v768
        %v771 = vsub.f32 1.0, %v769
        %v772 = vmul.f32 %v754, %v770
        %v773 = vmul.f32 %v755, %v771
        %v774 = vpack.c.bf16 %v773, %v772
        %v775 = vld [vmem:[#allocation10] sm:$0xf]
        %v776 = vld [vmem:[#allocation10 + $0x4] sm:$0xf]
        %v777 = vld [vmem:[#allocation10 + $0x8] sm:$0xf]
        %v778 = vld [vmem:[#allocation10 + $0xc] sm:$0xf]
        %v779 = vld [vmem:[#allocation10 + $0x10] sm:$0xf]
        %v780 = vld [vmem:[#allocation10 + $0x14] sm:$0xf]
        %v781 = vld [vmem:[#allocation10 + $0x18] sm:$0xf]
        %v782 = vld [vmem:[#allocation10 + $0x1c] sm:$0xf]
        %v783 = vld [vmem:[#allocation10 + $0x20] sm:$0xf]
        %v784 = vld [vmem:[#allocation10 + $0x24] sm:$0xf]
        %v785 = vld [vmem:[#allocation10 + $0x28] sm:$0xf]
        %v786 = vld [vmem:[#allocation10 + $0x2c] sm:$0xf]
        %v787 = vld [vmem:[#allocation10 + $0x30] sm:$0xf]
        %v788 = vld [vmem:[#allocation10 + $0x34] sm:$0xf]
        %v789 = vld [vmem:[#allocation10 + $0x38] sm:$0xf]
        %v790 = vld [vmem:[#allocation10 + $0x3c] sm:$0xf]
        %v791 = vld [vmem:[%s6] sm:$0x1]
        %v793 = vlaneseq
        %v794 = vshrl.u32 %v793, 7
        %v795 = vsub.s32 0, %v794
        %v796 = vrot.slane %v791, %v795
        %v814 = vunpack.c.l.b16 %v775
        %v815 = vunpack.c.l.b16 %v776
        %v816 = vunpack.c.l.b16 %v777
        %v817 = vunpack.c.l.b16 %v778
        %v818 = vunpack.c.l.b16 %v779
        %v819 = vunpack.c.l.b16 %v780
        %v820 = vunpack.c.l.b16 %v781
        %v821 = vunpack.c.l.b16 %v782
        %v822 = vunpack.c.l.b16 %v783
        %v823 = vunpack.c.l.b16 %v784
        %v824 = vunpack.c.l.b16 %v785
        %v825 = vunpack.c.l.b16 %v786
        %v826 = vunpack.c.l.b16 %v787
        %v827 = vunpack.c.l.b16 %v788
        %v828 = vunpack.c.l.b16 %v789
        %v829 = vunpack.c.l.b16 %v790
        %v830 = vpack.c.b16 %v815, %v814
        %v831 = vpack.c.b16 %v817, %v816
        %v832 = vpack.c.b16 %v819, %v818
        %v833 = vpack.c.b16 %v821, %v820
        %v834 = vpack.c.b16 %v823, %v822
        %v835 = vpack.c.b16 %v825, %v824
        %v836 = vpack.c.b16 %v827, %v826
        %v837 = vpack.c.b16 %v829, %v828
        %846 = vmatprep.subr.bf16.mxu0 0
        %847 = vmatpush1.bf16.msra.mxu0 %v830
        %848 = vmatprep.subr.bf16.mxu0 0
        %849 = vmatpush1.bf16.msra.mxu0 %v831
        %850 = vmatprep.subr.bf16.mxu0 0
        %851 = vmatpush1.bf16.msra.mxu0 %v832
        %852 = vmatprep.subr.bf16.mxu0 0
        %853 = vmatpush1.bf16.msra.mxu0 %v833
        %854 = vmatprep.subr.bf16.mxu0 0
        %855 = vmatpush1.bf16.msra.mxu0 %v834
        %856 = vmatprep.subr.bf16.mxu0 0
        %857 = vmatpush1.bf16.msra.mxu0 %v835
        %858 = vmatprep.subr.bf16.mxu0 0
        %859 = vmatpush1.bf16.msra.mxu0 %v836
        %860 = vmatprep.subr.bf16.mxu0 0
        %861 = vmatpush1.bf16.msra.mxu0 %v837
        %862 = vmatprep.subr.bf16.mxu0 0
        %863 = vmatpush1.bf16.msra.mxu0 0
        %864 = vmatprep.subr.bf16.mxu0 0
        %865 = vmatpush1.bf16.msra.mxu0 0
        %866 = vmatprep.subr.bf16.mxu0 0
        %867 = vmatpush1.bf16.msra.mxu0 0
        %868 = vmatprep.subr.bf16.mxu0 0
        %869 = vmatpush1.bf16.msra.mxu0 0
        %870 = vmatprep.subr.bf16.mxu0 0
        %871 = vmatpush1.bf16.msra.mxu0 0
        %872 = vmatprep.subr.bf16.mxu0 0
        %873 = vmatpush1.bf16.msra.mxu0 0
        %874 = vmatprep.subr.bf16.mxu0 0
        %875 = vmatpush1.bf16.msra.mxu0 0
        %876 = vmatprep.subr.bf16.mxu0 0
        %877 = vmatpush1.bf16.msra.mxu0 0
        %878 = vmatprep.mubr.bf16.mxu0 0
        %879 = vmatmul.mubr.bf16.gmra.mrb[0].mxu0 %v774
        %v880 = vpop.f32.mrb[0].mxu0
        %v881 = vadd.f32 %v796, %v880
        %v882 = vpop.f32.mrb[0].mxu0
        %v883 = vpop.f32.mrb[0].mxu0
        %v884 = vadd.f32 %v796, %v883
        %v885 = vpop.f32.mrb[0].mxu0
        %886 = vdwg.mxu0
        %v887 = vmul.f32 %v881, 1.442695
        %v888 = vpow.pop %v887
        %v889 = vmul.f32 %v884, 1.442695
        %v890 = vpow.pop %v889
        %v891 = vadd.f32 %v888, 1.0
        %v892 = vadd.f32 %v890, 1.0
        %v893 = vmul.f32 %v891, %v891
        %v894 = vmul.f32 %v892, %v892
        %v895 = vadd.f32 %v893, 1.0
        %v896 = vadd.f32 %v894, 1.0
        %v897 = vrcp.pop %v895
        %v898 = vrcp.pop %v896
        %v899 = vmul.f32 %v897, 2.0
        %v900 = vmul.f32 %v898, 2.0
        %v901 = vsub.f32 1.0, %v899
        %v902 = vsub.f32 1.0, %v900
        %v903 = vmul.f32 %v881, %v901
        %v904 = vmul.f32 %v884, %v902
        %v905 = vpack.c.bf16 %v904, %v903
        %v906 = vld [vmem:[#allocation11] sm:$0xf]
        %v907 = vld [vmem:[#allocation11 + $0x4] sm:$0xf]
        %v908 = vld [vmem:[#allocation11 + $0x8] sm:$0xf]
        %v909 = vld [vmem:[#allocation11 + $0xc] sm:$0xf]
        %v910 = vld [vmem:[#allocation11 + $0x10] sm:$0xf]
        %v911 = vld [vmem:[#allocation11 + $0x14] sm:$0xf]
        %v912 = vld [vmem:[#allocation11 + $0x18] sm:$0xf]
        %v913 = vld [vmem:[#allocation11 + $0x1c] sm:$0xf]
        %v914 = vld [vmem:[#allocation11 + $0x20] sm:$0xf]
        %v915 = vld [vmem:[#allocation11 + $0x24] sm:$0xf]
        %v916 = vld [vmem:[#allocation11 + $0x28] sm:$0xf]
        %v917 = vld [vmem:[#allocation11 + $0x2c] sm:$0xf]
        %v918 = vld [vmem:[#allocation11 + $0x30] sm:$0xf]
        %v919 = vld [vmem:[#allocation11 + $0x34] sm:$0xf]
        %v920 = vld [vmem:[#allocation11 + $0x38] sm:$0xf]
        %v921 = vld [vmem:[#allocation11 + $0x3c] sm:$0xf]
        %v922 = vld [vmem:[%s8] sm:$0x1]
        %v924 = vlaneseq
        %v925 = vshrl.u32 %v924, 7
        %v926 = vsub.s32 0, %v925
        %v927 = vrot.slane %v922, %v926
        %v945 = vunpack.c.l.b16 %v906
        %v946 = vunpack.c.l.b16 %v907
        %v947 = vunpack.c.l.b16 %v908
        %v948 = vunpack.c.l.b16 %v909
        %v949 = vunpack.c.l.b16 %v910
        %v950 = vunpack.c.l.b16 %v911
        %v951 = vunpack.c.l.b16 %v912
        %v952 = vunpack.c.l.b16 %v913
        %v953 = vunpack.c.l.b16 %v914
        %v954 = vunpack.c.l.b16 %v915
        %v955 = vunpack.c.l.b16 %v916
        %v956 = vunpack.c.l.b16 %v917
        %v957 = vunpack.c.l.b16 %v918
        %v958 = vunpack.c.l.b16 %v919
        %v959 = vunpack.c.l.b16 %v920
        %v960 = vunpack.c.l.b16 %v921
        %v961 = vpack.c.b16 %v946, %v945
        %v962 = vpack.c.b16 %v948, %v947
        %v963 = vpack.c.b16 %v950, %v949
        %v964 = vpack.c.b16 %v952, %v951
        %v965 = vpack.c.b16 %v954, %v953
        %v966 = vpack.c.b16 %v956, %v955
        %v967 = vpack.c.b16 %v958, %v957
        %v968 = vpack.c.b16 %v960, %v959
        %977 = vmatprep.subr.bf16.mxu0 0
        %978 = vmatpush1.bf16.msra.mxu0 %v961
        %979 = vmatprep.subr.bf16.mxu0 0
        %980 = vmatpush1.bf16.msra.mxu0 %v962
        %981 = vmatprep.subr.bf16.mxu0 0
        %982 = vmatpush1.bf16.msra.mxu0 %v963
        %983 = vmatprep.subr.bf16.mxu0 0
        %984 = vmatpush1.bf16.msra.mxu0 %v964
        %985 = vmatprep.subr.bf16.mxu0 0
        %986 = vmatpush1.bf16.msra.mxu0 %v965
        %987 = vmatprep.subr.bf16.mxu0 0
        %988 = vmatpush1.bf16.msra.mxu0 %v966
        %989 = vmatprep.subr.bf16.mxu0 0
        %990 = vmatpush1.bf16.msra.mxu0 %v967
        %991 = vmatprep.subr.bf16.mxu0 0
        %992 = vmatpush1.bf16.msra.mxu0 %v968
        %993 = vmatprep.subr.bf16.mxu0 0
        %994 = vmatpush1.bf16.msra.mxu0 0
        %995 = vmatprep.subr.bf16.mxu0 0
        %996 = vmatpush1.bf16.msra.mxu0 0
        %997 = vmatprep.subr.bf16.mxu0 0
        %998 = vmatpush1.bf16.msra.mxu0 0
        %999 = vmatprep.subr.bf16.mxu0 0
        %1000 = vmatpush1.bf16.msra.mxu0 0
        %1001 = vmatprep.subr.bf16.mxu0 0
        %1002 = vmatpush1.bf16.msra.mxu0 0
        %1003 = vmatprep.subr.bf16.mxu0 0
        %1004 = vmatpush1.bf16.msra.mxu0 0
        %1005 = vmatprep.subr.bf16.mxu0 0
        %1006 = vmatpush1.bf16.msra.mxu0 0
        %1007 = vmatprep.subr.bf16.mxu0 0
        %1008 = vmatpush1.bf16.msra.mxu0 0
        %1009 = vmatprep.mubr.bf16.mxu0 0
        %1010 = vmatmul.mubr.bf16.gmra.mrb[0].mxu0 %v905
        %v1011 = vpop.f32.mrb[0].mxu0
        %v1012 = vadd.f32 %v927, %v1011
        %v1013 = vpop.f32.mrb[0].mxu0
        %v1014 = vpop.f32.mrb[0].mxu0
        %v1015 = vadd.f32 %v927, %v1014
        %v1016 = vpop.f32.mrb[0].mxu0
        %1017 = vdwg.mxu0
        %v1018 = vmul.f32 %v1012, 1.442695
        %v1019 = vpow.pop %v1018
        %v1020 = vmul.f32 %v1015, 1.442695
        %v1021 = vpow.pop %v1020
        %v1022 = vadd.f32 %v1019, 1.0
        %v1023 = vadd.f32 %v1021, 1.0
        %v1024 = vmul.f32 %v1022, %v1022
        %v1025 = vmul.f32 %v1023, %v1023
        %v1026 = vadd.f32 %v1024, 1.0
        %v1027 = vadd.f32 %v1025, 1.0
        %v1028 = vrcp.pop %v1026
        %v1029 = vrcp.pop %v1027
        %v1030 = vmul.f32 %v1028, 2.0
        %v1031 = vmul.f32 %v1029, 2.0
        %v1032 = vsub.f32 1.0, %v1030
        %v1033 = vsub.f32 1.0, %v1031
        %v1034 = vmul.f32 %v1012, %v1032
        %v1035 = vmul.f32 %v1015, %v1033
        %v1036 = vpack.c.bf16 %v1035, %v1034
        %v1037 = vld [vmem:[#allocation13] sm:$0xf]
        %v1038 = vld [vmem:[#allocation13 + $0x4] sm:$0xf]
        %v1039 = vld [vmem:[#allocation13 + $0x8] sm:$0xf]
        %v1040 = vld [vmem:[#allocation13 + $0xc] sm:$0xf]
        %v1041 = vld [vmem:[#allocation13 + $0x10] sm:$0xf]
        %v1042 = vld [vmem:[#allocation13 + $0x14] sm:$0xf]
        %v1043 = vld [vmem:[#allocation13 + $0x18] sm:$0xf]
        %v1044 = vld [vmem:[#allocation13 + $0x1c] sm:$0xf]
        %v1045 = vld [vmem:[#allocation13 + $0x20] sm:$0xf]
        %v1046 = vld [vmem:[#allocation13 + $0x24] sm:$0xf]
        %v1047 = vld [vmem:[#allocation13 + $0x28] sm:$0xf]
        %v1048 = vld [vmem:[#allocation13 + $0x2c] sm:$0xf]
        %v1049 = vld [vmem:[#allocation13 + $0x30] sm:$0xf]
        %v1050 = vld [vmem:[#allocation13 + $0x34] sm:$0xf]
        %v1051 = vld [vmem:[#allocation13 + $0x38] sm:$0xf]
        %v1052 = vld [vmem:[#allocation13 + $0x3c] sm:$0xf]
        %v1053 = vld [vmem:[%s10] sm:$0x1]
        %v1055 = vlaneseq
        %v1056 = vshrl.u32 %v1055, 7
        %v1057 = vsub.s32 0, %v1056
        %v1058 = vrot.slane %v1053, %v1057
        %v1076 = vunpack.c.l.b16 %v1037
        %v1077 = vunpack.c.l.b16 %v1038
        %v1078 = vunpack.c.l.b16 %v1039
        %v1079 = vunpack.c.l.b16 %v1040
        %v1080 = vunpack.c.l.b16 %v1041
        %v1081 = vunpack.c.l.b16 %v1042
        %v1082 = vunpack.c.l.b16 %v1043
        %v1083 = vunpack.c.l.b16 %v1044
        %v1084 = vunpack.c.l.b16 %v1045
        %v1085 = vunpack.c.l.b16 %v1046
        %v1086 = vunpack.c.l.b16 %v1047
        %v1087 = vunpack.c.l.b16 %v1048
        %v1088 = vunpack.c.l.b16 %v1049
        %v1089 = vunpack.c.l.b16 %v1050
        %v1090 = vunpack.c.l.b16 %v1051
        %v1091 = vunpack.c.l.b16 %v1052
        %v1092 = vpack.c.b16 %v1077, %v1076
        %v1093 = vpack.c.b16 %v1079, %v1078
        %v1094 = vpack.c.b16 %v1081, %v1080
        %v1095 = vpack.c.b16 %v1083, %v1082
        %v1096 = vpack.c.b16 %v1085, %v1084
        %v1097 = vpack.c.b16 %v1087, %v1086
        %v1098 = vpack.c.b16 %v1089, %v1088
        %v1099 = vpack.c.b16 %v1091, %v1090
        %1108 = vmatprep.subr.bf16.mxu0 0
        %1109 = vmatpush1.bf16.msra.mxu0 %v1092
        %1110 = vmatprep.subr.bf16.mxu0 0
        %1111 = vmatpush1.bf16.msra.mxu0 %v1093
        %1112 = vmatprep.subr.bf16.mxu0 0
        %1113 = vmatpush1.bf16.msra.mxu0 %v1094
        %1114 = vmatprep.subr.bf16.mxu0 0
        %1115 = vmatpush1.bf16.msra.mxu0 %v1095
        %1116 = vmatprep.subr.bf16.mxu0 0
        %1117 = vmatpush1.bf16.msra.mxu0 %v1096
        %1118 = vmatprep.subr.bf16.mxu0 0
        %1119 = vmatpush1.bf16.msra.mxu0 %v1097
        %1120 = vmatprep.subr.bf16.mxu0 0
        %1121 = vmatpush1.bf16.msra.mxu0 %v1098
        %1122 = vmatprep.subr.bf16.mxu0 0
        %1123 = vmatpush1.bf16.msra.mxu0 %v1099
        %1124 = vmatprep.subr.bf16.mxu0 0
        %1125 = vmatpush1.bf16.msra.mxu0 0
        %1126 = vmatprep.subr.bf16.mxu0 0
        %1127 = vmatpush1.bf16.msra.mxu0 0
        %1128 = vmatprep.subr.bf16.mxu0 0
        %1129 = vmatpush1.bf16.msra.mxu0 0
        %1130 = vmatprep.subr.bf16.mxu0 0
        %1131 = vmatpush1.bf16.msra.mxu0 0
        %1132 = vmatprep.subr.bf16.mxu0 0
        %1133 = vmatpush1.bf16.msra.mxu0 0
        %1134 = vmatprep.subr.bf16.mxu0 0
        %1135 = vmatpush1.bf16.msra.mxu0 0
        %1136 = vmatprep.subr.bf16.mxu0 0
        %1137 = vmatpush1.bf16.msra.mxu0 0
        %1138 = vmatprep.subr.bf16.mxu0 0
        %1139 = vmatpush1.bf16.msra.mxu0 0
        %1140 = vmatprep.mubr.bf16.mxu0 0
        %1141 = vmatmul.mubr.bf16.gmra.mrb[0].mxu0 %v1036
        %v1142 = vpop.f32.mrb[0].mxu0
        %v1143 = vadd.f32 %v1058, %v1142
        %v1144 = vpop.f32.mrb[0].mxu0
        %v1145 = vpop.f32.mrb[0].mxu0
        %v1146 = vadd.f32 %v1058, %v1145
        %v1147 = vpop.f32.mrb[0].mxu0
        %1148 = vdwg.mxu0
        %v1149 = vmax.f32 %v1143, -1.0
        %v1150 = vmax.f32 %v1146, -1.0
        %v1151 = vmin.f32 %v1149, 1.0
        %v1152 = vmin.f32 %v1150, 1.0
        %1153 = vst [vmem:[%s516] sm:$0xff] %v1151
        %1154 = vst [vmem:[%s516 + $0x8] sm:$0xff] %v1152
        %s1155 = sand.u32 %s282, 1
        %s1156 = scalar_lea.sflag [#allocation4], %s1155
        %s1157 = sand.u32 %s282, 1
        %s1158 = smul.addr %s1157, 16
        %s1159 = scalar_lea.vmem [#allocation14], %s1158
        // Predicated region
        $region93: #{tpu_custom_call.1} parent=63 // pred_check
          %p1160 = pneg %p292
        $region94: #{tpu_custom_call.1} parent=63 // pred_check_branch
          %1162 = sbr.rel (%p1160) target = $region96
        $region95: #{tpu_custom_call.1} parent=63 // pred_region
          %s1163 = smul.u32 2, %s33
          %s1165 = ssub.s32 256, 256
          %1166 = vsyncadd %s1156, %s1165
          %s1167 = smul.addr %s1163, 128
          %s1168 = scalar_lea.hbm %s11, %s1167
          %s1169 = sshll.u32 %s1159, 4
          %s1170 = int_to_ptr.vmem [resolvable:$true] %s1169
          %1175 = dma.vmem_to_hbm [thread:$0]  %s1170, 256, %s1168, %s1156, 128, 128, 8
        $region96: #{tpu_custom_call.1} parent=63 // pred_fallthru
          _
      $region64: #{tpu_custom_call.1} parent=5 // pred_fallthru
        _
      %p1176 = scmp.le.s32.totalorder 2, %s28
      // Predicated region
      $region97: #{tpu_custom_call.1} parent=5 // pred_check
        %p1177 = pneg %p1176
      $region98: #{tpu_custom_call.1} parent=5 // pred_check_branch
        %1179 = sbr.rel (%p1177) target = $region100
      $region99: #{tpu_custom_call.1} parent=5 // pred_region
        %s1180 = ssub.s32 %s28, 2
        // Predicated region
        $region101: #{tpu_custom_call.1} parent=99 // pred_check
          %p1181 = pneg %p298
        $region102: #{tpu_custom_call.1} parent=99 // pred_check_branch
          %1183 = sbr.rel (%p1181) target = $region104
        $region103: #{tpu_custom_call.1} parent=99 // pred_region
          %s1184 = sand.u32 %s283, 1
          %s1185 = scalar_lea.sflag [#allocation4], %s1184
          %s1186 = sand.u32 %s283, 1
          %s1187 = smul.addr %s1186, 16
          %s1188 = scalar_lea.vmem [#allocation14], %s1187
          %1189 = dma.done %s1185, 256
        $region104: #{tpu_custom_call.1} parent=99 // pred_fallthru
          _
      $region100: #{tpu_custom_call.1} parent=5 // pred_fallthru
        _
    $region6: #{tpu_custom_call.1} parent=1 // loop_footer
      %s32 = sadd.s32 1, %s28
    $region7: #{tpu_custom_call.1} parent=1 // loop_footer_branch
      %27 = sbr.rel target = $region3
    $region8: #{tpu_custom_call.1} parent=1 // loop_exit
      _
    %1190 = vsyncpa [#allocation3], 1
    %s1191 = scalar_lea.sflag [#allocation3], 1
    %1192 = vsyncpa %s1191, 1
    %1193 = vsyncpa [#allocation6], 1
    %s1194 = scalar_lea.sflag [#allocation6], 1
    %1195 = vsyncpa %s1194, 1
    %1196 = vsyncpa [#allocation9], 1
    %1197 = vsyncpa [#allocation12], 1
    %1198 = vsyncpa [#allocation4], 1
    %s1199 = scalar_lea.sflag [#allocation4], 1
    %1200 = vsyncpa %s1199, 1

// kernel: tpu_custom_call.1
$region0: #{tpu_custom_call.1}
  #allocation0 [shape = 'u32[]', space=smem, size = 0x4, offset = 0x4, fixed_abs, tag = 'smem constant byte address 0x4 - core index']
  #allocation1 [shape = 'u32[144,128]{1,0:T(1,128)}', space=vmem, size = 0x12000, scoped, tag = 'internal scratch']
  %s0 = inlined_call_operand.hbm [shape: bf16[64,128], index: 0, kind: input, shape index: {}]
  %s1 = inlined_call_operand.hbm [shape: bf16[64,128], index: 1, kind: input, shape index: {}]
  %s2 = inlined_call_operand.hbm [shape: bf16[128,128], index: 2, kind: input, shape index: {}]
  %s3 = inlined_call_operand.hbm [shape: bf16[128,128], index: 3, kind: input, shape index: {}]
  %s4 = inlined_call_operand.vmem [shape: f32[1,128], index: 4, kind: input, shape index: {}]
  %s5 = inlined_call_operand.hbm [shape: bf16[128,128], index: 5, kind: input, shape index: {}]
  %s6 = inlined_call_operand.vmem [shape: f32[1,128], index: 6, kind: input, shape index: {}]
  %s7 = inlined_call_operand.hbm [shape: bf16[128,128], index: 7, kind: input, shape index: {}]
  %s8 = inlined_call_operand.vmem [shape: f32[1,128], index: 8, kind: input, shape index: {}]
  %s9 = inlined_call_operand.hbm [shape: bf16[128,128], index: 9, kind: input, shape index: {}]
  %s10 = inlined_call_operand.vmem [shape: f32[1,128], index: 10, kind: input, shape index: {}]
  %s11 = inlined_call_operand.hbm [shape: f32[64,128], index: 11, kind: output, shape index: {}]
  %s12 = sld [smem:[#allocation0]]
  $region105: #{tpu_custom_call.1} parent=0
    _
  %s14 = ssub.s32 1, %s12
  %s15 = scalar_select 0, %s14, %s12
  $region1: #{tpu_custom_call.1} parent=0
    #allocation2 [shape = 'u8[8192]{0}', space=vmem, size = 0x2000, scoped, tag = 'input window, operand 0']
    #allocation3 [shape = 's32[2]{0}', space=sflag, size = 0x8, scoped, tag = 'scoped memory for tpu_custom_call.1']
    #allocation4 [shape = 's32[2]{0}', space=sflag, size = 0x8, scoped, tag = 'scoped memory for tpu_custom_call.1']
    #allocation5 [shape = 'u8[8192]{0}', space=vmem, size = 0x2000, scoped, tag = 'input window, operand 1']
    #allocation6 [shape = 's32[2]{0}', space=sflag, size = 0x8, scoped, tag = 'scoped memory for tpu_custom_call.1']
    #allocation7 [shape = 'u8[32768]{0}', space=vmem, size = 0x8000, scoped, tag = 'input window, operand 2, single buffered']
    #allocation8 [shape = 'u8[32768]{0}', space=vmem, size = 0x8000, scoped, tag = 'input window, operand 3, single buffered']
    #allocation9 [shape = 's32[1]{0}', space=sflag, size = 0x4, scoped, tag = 'scoped memory for tpu_custom_call.1']
    #allocation10 [shape = 'u8[32768]{0}', space=vmem, size = 0x8000, scoped, tag = 'input window, operand 5, single buffered']
    #allocation11 [shape = 'u8[32768]{0}', space=vmem, size = 0x8000, scoped, tag = 'input window, operand 7, single buffered']
    #allocation12 [shape = 's32[1]{0}', space=sflag, size = 0x4, scoped, tag = 'scoped memory for tpu_custom_call.1']
    #allocation13 [shape = 'u8[32768]{0}', space=vmem, size = 0x8000, scoped, tag = 'input window, operand 9, single buffered']
    #allocation14 [shape = 'u8[16384]{0}', space=vmem, size = 0x4000, scoped, tag = 'output window, operand 0']
    %16 = vsyncpa [#allocation3], 0
    %s17 = scalar_lea.sflag [#allocation3], 1
    %18 = vsyncpa %s17, 0
    %19 = vsyncpa [#allocation6], 0
    %s20 = scalar_lea.sflag [#allocation6], 1
    %21 = vsyncpa %s20, 0
    %22 = vsyncpa [#allocation9], 0
    %23 = vsyncpa [#allocation12], 0
    %24 = vsyncpa [#allocation4], 0
    %s25 = scalar_lea.sflag [#allocation4], 1
    %26 = vsyncpa %s25, 0
    loop: start=0, step=1, limit=6
    $region2: #{tpu_custom_call.1} parent=1 // loop_pre_header
      _
    $region3: #{tpu_custom_call.1} parent=1 // loop_header
      %s28 = sphi 0, %s32
      %p29 = scmp.ge.s32.totalorder %s28, 6
      %s38 = sphi 0, %s40
      %s41 = sphi 0, %s38
      %s42 = sphi 0, %s41
      %s58 = sphi 0, %s42
      %s64 = sphi 0, %s66
      %s67 = sphi 0, %s64
      %s68 = sphi 0, %s67
      %s84 = sphi 0, %s68
      %s88 = sphi 0, %s88
      %s90 = sphi 0, %s88
      %s91 = sphi 0, %s90
      %s105 = sphi 0, %s91
      %s109 = sphi 0, %s109
      %s111 = sphi 0, %s109
      %s112 = sphi 0, %s111
      %s126 = sphi 0, %s112
      %s130 = sphi 0, %s130
      %s132 = sphi 0, %s130
      %s133 = sphi 0, %s132
      %s147 = sphi 0, %s133
      %s151 = sphi 0, %s151
      %s153 = sphi 0, %s151
      %s154 = sphi 0, %s153
      %s168 = sphi 0, %s154
      %s172 = sphi 0, %s172
      %s174 = sphi 0, %s172
      %s175 = sphi 0, %s174
      %s189 = sphi 0, %s175
      %s193 = sphi 0, %s193
      %s195 = sphi 0, %s193
      %s196 = sphi 0, %s195
      %s210 = sphi 0, %s196
      %s214 = sphi 0, %s214
      %s216 = sphi 0, %s214
      %s217 = sphi 0, %s216
      %s231 = sphi 0, %s217
      %s235 = sphi 0, %s235
      %s237 = sphi 0, %s235
      %s238 = sphi 0, %s237
      %s252 = sphi 0, %s238
      %s256 = sphi 0, %s256
      %s258 = sphi 0, %s256
      %s259 = sphi 0, %s258
      %s273 = sphi 0, %s259
      %s279 = sphi 0, %s281
      %s282 = sphi 0, %s279
      %s283 = sphi 0, %s282
      %s299 = sphi 0, %s283
    $region4: #{tpu_custom_call.1} parent=1 // loop_header_branch
      %31 = sbr.rel (%p29) target = $region8
    $region5: #{tpu_custom_call.1} parent=1 // loop_body
      %s33 = ssub.s32 %s28, 1
      %s34 = ssub.s32 %s28, 2
      %s35 = sadd.s32 %s28, 1
      %s36 = ssub.s32 %s28, %s35
      %p37 = scmp.eq.s32.totalorder %s36, 0
      %s39 = sadd.s32 %s38, 1
      %s40 = scalar_select %p37, %s38, %s39
      %p43 = pneg %p37
      %p44 = scmp.eq.s32.totalorder %s28, 3
      %p45 = por %p43, %p44
      %p46 = scmp.ne.s32.totalorder %s38, %s41
      %p47 = scmp.eq.s32.totalorder %s28, 0
      %p48 = por %p46, %p47
      %p49 = scmp.ne.s32.totalorder %s38, %s41
      %p50 = scmp.eq.s32.totalorder %s33, 3
      %p51 = por %p49, %p50
      %p52 = scmp.ne.s32.totalorder %s41, %s42
      %p53 = scmp.eq.s32.totalorder %s33, 0
      %p54 = por %p52, %p53
      %p55 = scmp.ne.s32.totalorder %s41, %s42
      %p56 = scmp.eq.s32.totalorder %s34, 3
      %p57 = por %p55, %p56
      %p59 = scmp.ne.s32.totalorder %s42, %s58
      %p60 = scmp.eq.s32.totalorder %s34, 0
      %p61 = por %p59, %p60
      %s62 = ssub.s32 %s28, %s35
      %p63 = scmp.eq.s32.totalorder %s62, 0
      %s65 = sadd.s32 %s64, 1
      %s66 = scalar_select %p63, %s64, %s65
      %p69 = pneg %p63
      %p70 = scmp.eq.s32.totalorder %s28, 3
      %p71 = por %p69, %p70
      %p72 = scmp.ne.s32.totalorder %s64, %s67
      %p73 = scmp.eq.s32.totalorder %s28, 0
      %p74 = por %p72, %p73
      %p75 = scmp.ne.s32.totalorder %s64, %s67
      %p76 = scmp.eq.s32.totalorder %s33, 3
      %p77 = por %p75, %p76
      %p78 = scmp.ne.s32.totalorder %s67, %s68
      %p79 = scmp.eq.s32.totalorder %s33, 0
      %p80 = por %p78, %p79
      %p81 = scmp.ne.s32.totalorder %s67, %s68
      %p82 = scmp.eq.s32.totalorder %s34, 3
      %p83 = por %p81, %p82
      %p85 = scmp.ne.s32.totalorder %s68, %s84
      %p86 = scmp.eq.s32.totalorder %s34, 0
      %p87 = por %p85, %p86
      %s89 = sadd.s32 %s88, 1
      %p92 = scmp.eq.s32.totalorder %s28, 3
      %p93 = scmp.ne.s32.totalorder %s88, %s90
      %p94 = scmp.eq.s32.totalorder %s28, 0
      %p95 = por %p93, %p94
      %p96 = scmp.ne.s32.totalorder %s88, %s90
      %p97 = scmp.eq.s32.totalorder %s33, 3
      %p98 = por %p96, %p97
      %p99 = scmp.ne.s32.totalorder %s90, %s91
      %p100 = scmp.eq.s32.totalorder %s33, 0
      %p101 = por %p99, %p100
      %p102 = scmp.ne.s32.totalorder %s90, %s91
      %p103 = scmp.eq.s32.totalorder %s34, 3
      %p104 = por %p102, %p103
      %p106 = scmp.ne.s32.totalorder %s91, %s105
      %p107 = scmp.eq.s32.totalorder %s34, 0
      %p108 = por %p106, %p107
      %s110 = sadd.s32 %s109, 1
      %p113 = scmp.eq.s32.totalorder %s28, 3
      %p114 = scmp.ne.s32.totalorder %s109, %s111
      %p115 = scmp.eq.s32.totalorder %s28, 0
      %p116 = por %p114, %p115
      %p117 = scmp.ne.s32.totalorder %s109, %s111
      %p118 = scmp.eq.s32.totalorder %s33, 3
      %p119 = por %p117, %p118
      %p120 = scmp.ne.s32.totalorder %s111, %s112
      %p121 = scmp.eq.s32.totalorder %s33, 0
      %p122 = por %p120, %p121
      %p123 = scmp.ne.s32.totalorder %s111, %s112
      %p124 = scmp.eq.s32.totalorder %s34, 3
      %p125 = por %p123, %p124
      %p127 = scmp.ne.s32.totalorder %s112, %s126
      %p128 = scmp.eq.s32.totalorder %s34, 0
      %p129 = por %p127, %p128
      %s131 = sadd.s32 %s130, 1
      %p134 = scmp.eq.s32.totalorder %s28, 3
      %p135 = scmp.ne.s32.totalorder %s130, %s132
      %p136 = scmp.eq.s32.totalorder %s28, 0
      %p137 = por %p135, %p136
      %p138 = scmp.ne.s32.totalorder %s130, %s132
      %p139 = scmp.eq.s32.totalorder %s33, 3
      %p140 = por %p138, %p139
      %p141 = scmp.ne.s32.totalorder %s132, %s133
      %p142 = scmp.eq.s32.totalorder %s33, 0
      %p143 = por %p141, %p142
      %p144 = scmp.ne.s32.totalorder %s132, %s133
      %p145 = scmp.eq.s32.totalorder %s34, 3
      %p146 = por %p144, %p145
      %p148 = scmp.ne.s32.totalorder %s133, %s147
      %p149 = scmp.eq.s32.totalorder %s34, 0
      %p150 = por %p148, %p149
      %s152 = sadd.s32 %s151, 1
      %p155 = scmp.eq.s32.totalorder %s28, 3
      %p156 = scmp.ne.s32.totalorder %s151, %s153
      %p157 = scmp.eq.s32.totalorder %s28, 0
      %p158 = por %p156, %p157
      %p159 = scmp.ne.s32.totalorder %s151, %s153
      %p160 = scmp.eq.s32.totalorder %s33, 3
      %p161 = por %p159, %p160
      %p162 = scmp.ne.s32.totalorder %s153, %s154
      %p163 = scmp.eq.s32.totalorder %s33, 0
      %p164 = por %p162, %p163
      %p165 = scmp.ne.s32.totalorder %s153, %s154
      %p166 = scmp.eq.s32.totalorder %s34, 3
      %p167 = por %p165, %p166
      %p169 = scmp.ne.s32.totalorder %s154, %s168
      %p170 = scmp.eq.s32.totalorder %s34, 0
      %p171 = por %p169, %p170
      %s173 = sadd.s32 %s172, 1
      %p176 = scmp.eq.s32.totalorder %s28, 3
      %p177 = scmp.ne.s32.totalorder %s172, %s174
      %p178 = scmp.eq.s32.totalorder %s28, 0
      %p179 = por %p177, %p178
      %p180 = scmp.ne.s32.totalorder %s172, %s174
      %p181 = scmp.eq.s32.totalorder %s33, 3
      %p182 = por %p180, %p181
      %p183 = scmp.ne.s32.totalorder %s174, %s175
      %p184 = scmp.eq.s32.totalorder %s33, 0
      %p185 = por %p183, %p184
      %p186 = scmp.ne.s32.totalorder %s174, %s175
      %p187 = scmp.eq.s32.totalorder %s34, 3
      %p188 = por %p186, %p187
      %p190 = scmp.ne.s32.totalorder %s175, %s189
      %p191 = scmp.eq.s32.totalorder %s34, 0
      %p192 = por %p190, %p191
      %s194 = sadd.s32 %s193, 1
      %p197 = scmp.eq.s32.totalorder %s28, 3
      %p198 = scmp.ne.s32.totalorder %s193, %s195
      %p199 = scmp.eq.s32.totalorder %s28, 0
      %p200 = por %p198, %p199
      %p201 = scmp.ne.s32.totalorder %s193, %s195
      %p202 = scmp.eq.s32.totalorder %s33, 3
      %p203 = por %p201, %p202
      %p204 = scmp.ne.s32.totalorder %s195, %s196
      %p205 = scmp.eq.s32.totalorder %s33, 0
      %p206 = por %p204, %p205
      %p207 = scmp.ne.s32.totalorder %s195, %s196
      %p208 = scmp.eq.s32.totalorder %s34, 3
      %p209 = por %p207, %p208
      %p211 = scmp.ne.s32.totalorder %s196, %s210
      %p212 = scmp.eq.s32.totalorder %s34, 0
      %p213 = por %p211, %p212
      %s215 = sadd.s32 %s214, 1
      %p218 = scmp.eq.s32.totalorder %s28, 3
      %p219 = scmp.ne.s32.totalorder %s214, %s216
      %p220 = scmp.eq.s32.totalorder %s28, 0
      %p221 = por %p219, %p220
      %p222 = scmp.ne.s32.totalorder %s214, %s216
      %p223 = scmp.eq.s32.totalorder %s33, 3
      %p224 = por %p222, %p223
      %p225 = scmp.ne.s32.totalorder %s216, %s217
      %p226 = scmp.eq.s32.totalorder %s33, 0
      %p227 = por %p225, %p226
      %p228 = scmp.ne.s32.totalorder %s216, %s217
      %p229 = scmp.eq.s32.totalorder %s34, 3
      %p230 = por %p228, %p229
      %p232 = scmp.ne.s32.totalorder %s217, %s231
      %p233 = scmp.eq.s32.totalorder %s34, 0
      %p234 = por %p232, %p233
      %s236 = sadd.s32 %s235, 1
      %p239 = scmp.eq.s32.totalorder %s28, 3
      %p240 = scmp.ne.s32.totalorder %s235, %s237
      %p241 = scmp.eq.s32.totalorder %s28, 0
      %p242 = por %p240, %p241
      %p243 = scmp.ne.s32.totalorder %s235, %s237
      %p244 = scmp.eq.s32.totalorder %s33, 3
      %p245 = por %p243, %p244
      %p246 = scmp.ne.s32.totalorder %s237, %s238
      %p247 = scmp.eq.s32.totalorder %s33, 0
      %p248 = por %p246, %p247
      %p249 = scmp.ne.s32.totalorder %s237, %s238
      %p250 = scmp.eq.s32.totalorder %s34, 3
      %p251 = por %p249, %p250
      %p253 = scmp.ne.s32.totalorder %s238, %s252
      %p254 = scmp.eq.s32.totalorder %s34, 0
      %p255 = por %p253, %p254
      %s257 = sadd.s32 %s256, 1
      %p260 = scmp.eq.s32.totalorder %s28, 3
      %p261 = scmp.ne.s32.totalorder %s256, %s258
      %p262 = scmp.eq.s32.totalorder %s28, 0
      %p263 = por %p261, %p262
      %p264 = scmp.ne.s32.totalorder %s256, %s258
      %p265 = scmp.eq.s32.totalorder %s33, 3
      %p266 = por %p264, %p265
      %p267 = scmp.ne.s32.totalorder %s258, %s259
      %p268 = scmp.eq.s32.totalorder %s33, 0
      %p269 = por %p267, %p268
      %p270 = scmp.ne.s32.totalorder %s258, %s259
      %p271 = scmp.eq.s32.totalorder %s34, 3
      %p272 = por %p270, %p271
      %p274 = scmp.ne.s32.totalorder %s259, %s273
      %p275 = scmp.eq.s32.totalorder %s34, 0
      %p276 = por %p274, %p275
      %s277 = ssub.s32 %s28, %s35
      %p278 = scmp.eq.s32.totalorder %s277, 0
      %s280 = sadd.s32 %s279, 1
      %s281 = scalar_select %p278, %s279, %s280
      %p284 = pneg %p278
      %p285 = scmp.eq.s32.totalorder %s28, 3
      %p286 = por %p284, %p285
      %p287 = scmp.ne.s32.totalorder %s279, %s282
      %p288 = scmp.eq.s32.totalorder %s28, 0
      %p289 = por %p287, %p288
      %p290 = scmp.ne.s32.totalorder %s279, %s282
      %p291 = scmp.eq.s32.totalorder %s33, 3
      %p292 = por %p290, %p291
      %p293 = scmp.ne.s32.totalorder %s282, %s283
      %p294 = scmp.eq.s32.totalorder %s33, 0
      %p295 = por %p293, %p294
      %p296 = scmp.ne.s32.totalorder %s282, %s283
      %p297 = scmp.eq.s32.totalorder %s34, 3
      %p298 = por %p296, %p297
      %p300 = scmp.ne.s32.totalorder %s283, %s299
      %p301 = scmp.eq.s32.totalorder %s34, 0
      %p302 = por %p300, %p301
      %p303 = scmp.le.s32.totalorder 1, %s28
      %p304 = scmp.lt.s32.totalorder %s28, 5
      %p305 = pnand %p303, %p304
      %p306 = pneg %p305
      // Predicated region
      $region9: #{tpu_custom_call.1} parent=5 // pred_check
        _
      $region10: #{tpu_custom_call.1} parent=5 // pred_check_branch
        %308 = sbr.rel (%p305) target = $region12
      $region11: #{tpu_custom_call.1} parent=5 // pred_region
        %s309 = ssub.s32 %s28, 1
        // Predicated region
        $region13: #{tpu_custom_call.1} parent=11 // pred_check
          %p310 = pneg %p101
        $region14: #{tpu_custom_call.1} parent=11 // pred_check_branch
          %312 = sbr.rel (%p310) target = $region16
        $region15: #{tpu_custom_call.1} parent=11 // pred_region
          %s314 = ssub.s32 1024, 1024
          %315 = vsyncadd [#allocation6], %s314
          %s316 = sshll.u32 [#allocation7], 4
          %s317 = int_to_ptr.vmem [resolvable:$true] %s316
          %322 = dma.hbm_to_vmem [thread:$0]  %s2, 1024, %s317, [#allocation6], 64, 64, 4
        $region16: #{tpu_custom_call.1} parent=11 // pred_fallthru
          _
        // Predicated region
        $region17: #{tpu_custom_call.1} parent=11 // pred_check
          %p323 = pneg %p122
        $region18: #{tpu_custom_call.1} parent=11 // pred_check_branch
          %325 = sbr.rel (%p323) target = $region20
        $region19: #{tpu_custom_call.1} parent=11 // pred_region
          %s327 = ssub.s32 1024, 1024
          %328 = vsyncadd [#allocation9], %s327
          %s329 = sshll.u32 [#allocation8], 4
          %s330 = int_to_ptr.vmem [resolvable:$true] %s329
          %335 = dma.hbm_to_vmem [thread:$0]  %s3, 1024, %s330, [#allocation9], 64, 64, 4
        $region20: #{tpu_custom_call.1} parent=11 // pred_fallthru
          _
        // Predicated region
        $region21: #{tpu_custom_call.1} parent=11 // pred_check
          %p336 = pneg %p143
        $region22: #{tpu_custom_call.1} parent=11 // pred_check_branch
          %338 = sbr.rel (%p336) target = $region24
        $region23: #{tpu_custom_call.1} parent=11 // pred_region
          _
        $region24: #{tpu_custom_call.1} parent=11 // pred_fallthru
          _
        // Predicated region
        $region25: #{tpu_custom_call.1} parent=11 // pred_check
          %p339 = pneg %p164
        $region26: #{tpu_custom_call.1} parent=11 // pred_check_branch
          %341 = sbr.rel (%p339) target = $region28
        $region27: #{tpu_custom_call.1} parent=11 // pred_region
          %s343 = ssub.s32 1024, 1024
          %344 = vsyncadd [#allocation9], %s343
          %s345 = sshll.u32 [#allocation10], 4
          %s346 = int_to_ptr.vmem [resolvable:$true] %s345
          %351 = dma.hbm_to_vmem [thread:$0]  %s5, 1024, %s346, [#allocation9], 64, 64, 4
        $region28: #{tpu_custom_call.1} parent=11 // pred_fallthru
          _
        // Predicated region
        $region29: #{tpu_custom_call.1} parent=11 // pred_check
          %p352 = pneg %p185
        $region30: #{tpu_custom_call.1} parent=11 // pred_check_branch
          %354 = sbr.rel (%p352) target = $region32
        $region31: #{tpu_custom_call.1} parent=11 // pred_region
          _
        $region32: #{tpu_custom_call.1} parent=11 // pred_fallthru
          _
        // Predicated region
        $region33: #{tpu_custom_call.1} parent=11 // pred_check
          %p355 = pneg %p206
        $region34: #{tpu_custom_call.1} parent=11 // pred_check_branch
          %357 = sbr.rel (%p355) target = $region36
        $region35: #{tpu_custom_call.1} parent=11 // pred_region
          %s359 = ssub.s32 1024, 1024
          %360 = vsyncadd [#allocation12], %s359
          %s361 = sshll.u32 [#allocation11], 4
          %s362 = int_to_ptr.vmem [resolvable:$true] %s361
          %367 = dma.hbm_to_vmem [thread:$0]  %s7, 1024, %s362, [#allocation12], 64, 64, 4
        $region36: #{tpu_custom_call.1} parent=11 // pred_fallthru
          _
        // Predicated region
        $region37: #{tpu_custom_call.1} parent=11 // pred_check
          %p368 = pneg %p227
        $region38: #{tpu_custom_call.1} parent=11 // pred_check_branch
          %370 = sbr.rel (%p368) target = $region40
        $region39: #{tpu_custom_call.1} parent=11 // pred_region
          _
        $region40: #{tpu_custom_call.1} parent=11 // pred_fallthru
          _
        // Predicated region
        $region41: #{tpu_custom_call.1} parent=11 // pred_check
          %p371 = pneg %p248
        $region42: #{tpu_custom_call.1} parent=11 // pred_check_branch
          %373 = sbr.rel (%p371) target = $region44
        $region43: #{tpu_custom_call.1} parent=11 // pred_region
          %s375 = ssub.s32 1024, 1024
          %376 = vsyncadd [#allocation12], %s375
          %s377 = sshll.u32 [#allocation13], 4
          %s378 = int_to_ptr.vmem [resolvable:$true] %s377
          %383 = dma.hbm_to_vmem [thread:$0]  %s9, 1024, %s378, [#allocation12], 64, 64, 4
        $region44: #{tpu_custom_call.1} parent=11 // pred_fallthru
          _
        // Predicated region
        $region45: #{tpu_custom_call.1} parent=11 // pred_check
          %p384 = pneg %p269
        $region46: #{tpu_custom_call.1} parent=11 // pred_check_branch
          %386 = sbr.rel (%p384) target = $region48
        $region47: #{tpu_custom_call.1} parent=11 // pred_region
          _
        $region48: #{tpu_custom_call.1} parent=11 // pred_fallthru
          _
      $region12: #{tpu_custom_call.1} parent=5 // pred_fallthru
        _
      %p387 = scmp.lt.s32.totalorder %s28, 4
      // Predicated region
      $region49: #{tpu_custom_call.1} parent=5 // pred_check
        %p388 = pneg %p387
      $region50: #{tpu_custom_call.1} parent=5 // pred_check_branch
        %390 = sbr.rel (%p388) target = $region52
      $region51: #{tpu_custom_call.1} parent=5 // pred_region
        // Predicated region
        $region53: #{tpu_custom_call.1} parent=51 // pred_check
          %p391 = pneg %p48
        $region54: #{tpu_custom_call.1} parent=51 // pred_check_branch
          %393 = sbr.rel (%p391) target = $region56
        $region55: #{tpu_custom_call.1} parent=51 // pred_region
          %s394 = sand.u32 %s38, 1
          %s395 = scalar_lea.sflag [#allocation3], %s394
          %s396 = sand.u32 %s38, 1
          %s397 = smul.addr %s396, 8
          %s398 = scalar_lea.vmem [#allocation2], %s397
          %s399 = smul.u32 2, %s28
          %s401 = ssub.s32 128, 128
          %402 = vsyncadd %s395, %s401
          %s403 = smul.addr %s399, 64
          %s404 = scalar_lea.hbm %s0, %s403
          %s405 = sshll.u32 %s398, 4
          %s406 = int_to_ptr.vmem [resolvable:$true] %s405
          %411 = dma.hbm_to_vmem [thread:$0]  %s404, 128, %s406, %s395, 64, 64, 4
        $region56: #{tpu_custom_call.1} parent=51 // pred_fallthru
          _
        // Predicated region
        $region57: #{tpu_custom_call.1} parent=51 // pred_check
          %p412 = pneg %p74
        $region58: #{tpu_custom_call.1} parent=51 // pred_check_branch
          %414 = sbr.rel (%p412) target = $region60
        $region59: #{tpu_custom_call.1} parent=51 // pred_region
          %s415 = sand.u32 %s28, 1
          %s416 = scalar_lea.sflag [#allocation6], %s415
          %s417 = sand.u32 %s64, 1
          %s418 = smul.addr %s417, 8
          %s419 = scalar_lea.vmem [#allocation5], %s418
          %s420 = smul.u32 2, %s28
          %s422 = ssub.s32 128, 128
          %423 = vsyncadd %s416, %s422
          %s424 = smul.addr %s420, 64
          %s425 = scalar_lea.hbm %s1, %s424
          %s426 = sshll.u32 %s419, 4
          %s427 = int_to_ptr.vmem [resolvable:$true] %s426
          %432 = dma.hbm_to_vmem [thread:$0]  %s425, 128, %s427, %s416, 64, 64, 4
        $region60: #{tpu_custom_call.1} parent=51 // pred_fallthru
          _
      $region52: #{tpu_custom_call.1} parent=5 // pred_fallthru
        _
      %p433 = scmp.le.s32.totalorder 1, %s28
      %p434 = scmp.lt.s32.totalorder %s28, 5
      %p435 = pnand %p433, %p434
      %p436 = pneg %p435
      // Predicated region
      $region61: #{tpu_custom_call.1} parent=5 // pred_check
        _
      $region62: #{tpu_custom_call.1} parent=5 // pred_check_branch
        %438 = sbr.rel (%p435) target = $region64
      $region63: #{tpu_custom_call.1} parent=5 // pred_region
        %s439 = ssub.s32 %s28, 1
        %s440 = sand.u32 %s41, 1
        %s441 = scalar_lea.sflag [#allocation3], %s440
        %s442 = sand.u32 %s41, 1
        %s443 = smul.addr %s442, 8
        %s444 = scalar_lea.vmem [#allocation2], %s443
        // Predicated region
        $region65: #{tpu_custom_call.1} parent=63 // pred_check
          %p445 = pneg %p54
        $region66: #{tpu_custom_call.1} parent=63 // pred_check_branch
          %447 = sbr.rel (%p445) target = $region68
        $region67: #{tpu_custom_call.1} parent=63 // pred_region
          %448 = dma.done %s441, 128
        $region68: #{tpu_custom_call.1} parent=63 // pred_fallthru
          _
        %s449 = sand.u32 %s33, 1
        %s450 = scalar_lea.sflag [#allocation6], %s449
        %s451 = sand.u32 %s67, 1
        %s452 = smul.addr %s451, 8
        %s453 = scalar_lea.vmem [#allocation5], %s452
        // Predicated region
        $region69: #{tpu_custom_call.1} parent=63 // pred_check
          %p454 = pneg %p80
        $region70: #{tpu_custom_call.1} parent=63 // pred_check_branch
          %456 = sbr.rel (%p454) target = $region72
        $region71: #{tpu_custom_call.1} parent=63 // pred_region
          %457 = dma.done %s450, 128
        $region72: #{tpu_custom_call.1} parent=63 // pred_fallthru
          _
        // Predicated region
        $region73: #{tpu_custom_call.1} parent=63 // pred_check
          %p458 = pneg %p101
        $region74: #{tpu_custom_call.1} parent=63 // pred_check_branch
          %460 = sbr.rel (%p458) target = $region76
        $region75: #{tpu_custom_call.1} parent=63 // pred_region
          %461 = dma.done [#allocation6], 1024
        $region76: #{tpu_custom_call.1} parent=63 // pred_fallthru
          _
        // Predicated region
        $region77: #{tpu_custom_call.1} parent=63 // pred_check
          %p462 = pneg %p122
        $region78: #{tpu_custom_call.1} parent=63 // pred_check_branch
          %464 = sbr.rel (%p462) target = $region80
        $region79: #{tpu_custom_call.1} parent=63 // pred_region
          %465 = dma.done [#allocation9], 1024
        $region80: #{tpu_custom_call.1} parent=63 // pred_fallthru
          _
        // Predicated region
        $region81: #{tpu_custom_call.1} parent=63 // pred_check
          %p466 = pneg %p164
        $region82: #{tpu_custom_call.1} parent=63 // pred_check_branch
          %468 = sbr.rel (%p466) target = $region84
        $region83: #{tpu_custom_call.1} parent=63 // pred_region
          %469 = dma.done [#allocation9], 1024
        $region84: #{tpu_custom_call.1} parent=63 // pred_fallthru
          _
        // Predicated region
        $region85: #{tpu_custom_call.1} parent=63 // pred_check
          %p470 = pneg %p206
        $region86: #{tpu_custom_call.1} parent=63 // pred_check_branch
          %472 = sbr.rel (%p470) target = $region88
        $region87: #{tpu_custom_call.1} parent=63 // pred_region
          %473 = dma.done [#allocation12], 1024
        $region88: #{tpu_custom_call.1} parent=63 // pred_fallthru
          _
        // Predicated region
        $region89: #{tpu_custom_call.1} parent=63 // pred_check
          %p474 = pneg %p248
        $region90: #{tpu_custom_call.1} parent=63 // pred_check_branch
          %476 = sbr.rel (%p474) target = $region92
        $region91: #{tpu_custom_call.1} parent=63 // pred_region
          %477 = dma.done [#allocation12], 1024
        $region92: #{tpu_custom_call.1} parent=63 // pred_fallthru
          _
        %s478 = sand.u32 %s41, 1
        %s479 = scalar_lea.sflag [#allocation3], %s478
        %s480 = sand.u32 %s41, 1
        %s481 = smul.addr %s480, 8
        %s482 = scalar_lea.vmem [#allocation2], %s481
        %p483 = pneg %p54
        %p484 = pneg %p51
        %s485 = sand.u32 %s33, 1
        %s486 = scalar_lea.sflag [#allocation6], %s485
        %s487 = sand.u32 %s67, 1
        %s488 = smul.addr %s487, 8
        %s489 = scalar_lea.vmem [#allocation5], %s488
        %p490 = pneg %p80
        %p491 = pneg %p77
        %p492 = pneg %p101
        %p493 = pneg %p98
        %p494 = pneg %p122
        %p495 = pneg %p119
        %p496 = pneg %p143
        %p497 = pneg %p140
        %p498 = pneg %p164
        %p499 = pneg %p161
        %p500 = pneg %p185
        %p501 = pneg %p182
        %p502 = pneg %p206
        %p503 = pneg %p203
        %p504 = pneg %p227
        %p505 = pneg %p224
        %p506 = pneg %p248
        %p507 = pneg %p245
        %p508 = pneg %p269
        %p509 = pneg %p266
        %p510 = pneg %p295
        %p511 = pneg %p292
        %s512 = sand.u32 %s282, 1
        %s513 = scalar_lea.sflag [#allocation4], %s512
        %s514 = sand.u32 %s282, 1
        %s515 = smul.addr %s514, 16
        %s516 = scalar_lea.vmem [#allocation14], %s515
        %s517 = smul.u32 2, %s33
        %s518 = smul.u32 2, %s33
        %s519 = smul.u32 2, %s33
        %v521 = vld [vmem:[%s453] sm:$0xf]
        %v522 = vld [vmem:[%s453 + $0x4] sm:$0xf]
        %v523 = vld [vmem:[#allocation8] sm:$0xf]
        %v524 = vld [vmem:[#allocation8 + $0x4] sm:$0xf]
        %v525 = vld [vmem:[#allocation8 + $0x8] sm:$0xf]
        %v526 = vld [vmem:[#allocation8 + $0xc] sm:$0xf]
        %v527 = vld [vmem:[#allocation8 + $0x10] sm:$0xf]
        %v528 = vld [vmem:[#allocation8 + $0x14] sm:$0xf]
        %v529 = vld [vmem:[#allocation8 + $0x18] sm:$0xf]
        %v530 = vld [vmem:[#allocation8 + $0x1c] sm:$0xf]
        %v531 = vld [vmem:[#allocation8 + $0x20] sm:$0xf]
        %v532 = vld [vmem:[#allocation8 + $0x24] sm:$0xf]
        %v533 = vld [vmem:[#allocation8 + $0x28] sm:$0xf]
        %v534 = vld [vmem:[#allocation8 + $0x2c] sm:$0xf]
        %v535 = vld [vmem:[#allocation8 + $0x30] sm:$0xf]
        %v536 = vld [vmem:[#allocation8 + $0x34] sm:$0xf]
        %v537 = vld [vmem:[#allocation8 + $0x38] sm:$0xf]
        %v538 = vld [vmem:[#allocation8 + $0x3c] sm:$0xf]
        %v539 = vld [vmem:[%s444] sm:$0xf]
        %v540 = vld [vmem:[%s444 + $0x4] sm:$0xf]
        %v541 = vld [vmem:[#allocation7] sm:$0xf]
        %v542 = vld [vmem:[#allocation7 + $0x4] sm:$0xf]
        %v543 = vld [vmem:[#allocation7 + $0x8] sm:$0xf]
        %v544 = vld [vmem:[#allocation7 + $0xc] sm:$0xf]
        %v545 = vld [vmem:[#allocation7 + $0x10] sm:$0xf]
        %v546 = vld [vmem:[#allocation7 + $0x14] sm:$0xf]
        %v547 = vld [vmem:[#allocation7 + $0x18] sm:$0xf]
        %v548 = vld [vmem:[#allocation7 + $0x1c] sm:$0xf]
        %v549 = vld [vmem:[#allocation7 + $0x20] sm:$0xf]
        %v550 = vld [vmem:[#allocation7 + $0x24] sm:$0xf]
        %v551 = vld [vmem:[#allocation7 + $0x28] sm:$0xf]
        %v552 = vld [vmem:[#allocation7 + $0x2c] sm:$0xf]
        %v553 = vld [vmem:[#allocation7 + $0x30] sm:$0xf]
        %v554 = vld [vmem:[#allocation7 + $0x34] sm:$0xf]
        %v555 = vld [vmem:[#allocation7 + $0x38] sm:$0xf]
        %v556 = vld [vmem:[#allocation7 + $0x3c] sm:$0xf]
        %v559 = vunpack.c.l.b16 %v539
        %v560 = vunpack.c.l.b16 %v540
        %v561 = vpack.c.b16 %v560, %v559
        %v579 = vunpack.c.l.b16 %v541
        %v580 = vunpack.c.l.b16 %v542
        %v581 = vunpack.c.l.b16 %v543
        %v582 = vunpack.c.l.b16 %v544
        %v583 = vunpack.c.l.b16 %v545
        %v584 = vunpack.c.l.b16 %v546
        %v585 = vunpack.c.l.b16 %v547
        %v586 = vunpack.c.l.b16 %v548
        %v587 = vunpack.c.l.b16 %v549
        %v588 = vunpack.c.l.b16 %v550
        %v589 = vunpack.c.l.b16 %v551
        %v590 = vunpack.c.l.b16 %v552
        %v591 = vunpack.c.l.b16 %v553
        %v592 = vunpack.c.l.b16 %v554
        %v593 = vunpack.c.l.b16 %v555
        %v594 = vunpack.c.l.b16 %v556
        %v595 = vpack.c.b16 %v580, %v579
        %v596 = vpack.c.b16 %v582, %v581
        %v597 = vpack.c.b16 %v584, %v583
        %v598 = vpack.c.b16 %v586, %v585
        %v599 = vpack.c.b16 %v588, %v587
        %v600 = vpack.c.b16 %v590, %v589
        %v601 = vpack.c.b16 %v592, %v591
        %v602 = vpack.c.b16 %v594, %v593
        %611 = vmatprep.subr.bf16.mxu0 0
        %612 = vmatpush1.bf16.msra.mxu0 %v595
        %613 = vmatprep.subr.bf16.mxu0 0
        %614 = vmatpush1.bf16.msra.mxu0 %v596
        %615 = vmatprep.subr.bf16.mxu0 0
        %616 = vmatpush1.bf16.msra.mxu0 %v597
        %617 = vmatprep.subr.bf16.mxu0 0
        %618 = vmatpush1.bf16.msra.mxu0 %v598
        %619 = vmatprep.subr.bf16.mxu0 0
        %620 = vmatpush1.bf16.msra.mxu0 %v599
        %621 = vmatprep.subr.bf16.mxu0 0
        %622 = vmatpush1.bf16.msra.mxu0 %v600
        %623 = vmatprep.subr.bf16.mxu0 0
        %624 = vmatpush1.bf16.msra.mxu0 %v601
        %625 = vmatprep.subr.bf16.mxu0 0
        %626 = vmatpush1.bf16.msra.mxu0 %v602
        %627 = vmatprep.subr.bf16.mxu0 0
        %628 = vmatpush1.bf16.msra.mxu0 0
        %629 = vmatprep.subr.bf16.mxu0 0
        %630 = vmatpush1.bf16.msra.mxu0 0
        %631 = vmatprep.subr.bf16.mxu0 0
        %632 = vmatpush1.bf16.msra.mxu0 0
        %633 = vmatprep.subr.bf16.mxu0 0
        %634 = vmatpush1.bf16.msra.mxu0 0
        %635 = vmatprep.subr.bf16.mxu0 0
        %636 = vmatpush1.bf16.msra.mxu0 0
        %637 = vmatprep.subr.bf16.mxu0 0
        %638 = vmatpush1.bf16.msra.mxu0 0
        %639 = vmatprep.subr.bf16.mxu0 0
        %640 = vmatpush1.bf16.msra.mxu0 0
        %641 = vmatprep.subr.bf16.mxu0 0
        %642 = vmatpush1.bf16.msra.mxu0 0
        %643 = vmatprep.mubr.bf16.mxu0 0
        %644 = vmatmul.mubr.bf16.gmra.mrb[0].mxu0 %v561
        %v645 = vpop.f32.mrb[0].mxu0
        %v646 = vadd.f32 0.0, %v645
        %v647 = vpop.f32.mrb[0].mxu0
        %v648 = vpop.f32.mrb[0].mxu0
        %v649 = vadd.f32 0.0, %v648
        %v650 = vpop.f32.mrb[0].mxu0
        %651 = vdwg.mxu0
        %v654 = vunpack.c.l.b16 %v521
        %v655 = vunpack.c.l.b16 %v522
        %v656 = vpack.c.b16 %v655, %v654
        %v674 = vunpack.c.l.b16 %v523
        %v675 = vunpack.c.l.b16 %v524
        %v676 = vunpack.c.l.b16 %v525
        %v677 = vunpack.c.l.b16 %v526
        %v678 = vunpack.c.l.b16 %v527
        %v679 = vunpack.c.l.b16 %v528
        %v680 = vunpack.c.l.b16 %v529
        %v681 = vunpack.c.l.b16 %v530
        %v682 = vunpack.c.l.b16 %v531
        %v683 = vunpack.c.l.b16 %v532
        %v684 = vunpack.c.l.b16 %v533
        %v685 = vunpack.c.l.b16 %v534
        %v686 = vunpack.c.l.b16 %v535
        %v687 = vunpack.c.l.b16 %v536
        %v688 = vunpack.c.l.b16 %v537
        %v689 = vunpack.c.l.b16 %v538
        %v690 = vpack.c.b16 %v675, %v674
        %v691 = vpack.c.b16 %v677, %v676
        %v692 = vpack.c.b16 %v679, %v678
        %v693 = vpack.c.b16 %v681, %v680
        %v694 = vpack.c.b16 %v683, %v682
        %v695 = vpack.c.b16 %v685, %v684
        %v696 = vpack.c.b16 %v687, %v686
        %v697 = vpack.c.b16 %v689, %v688
        %706 = vmatprep.subr.bf16.mxu0 0
        %707 = vmatpush1.bf16.msra.mxu0 %v690
        %708 = vmatprep.subr.bf16.mxu0 0
        %709 = vmatpush1.bf16.msra.mxu0 %v691
        %710 = vmatprep.subr.bf16.mxu0 0
        %711 = vmatpush1.bf16.msra.mxu0 %v692
        %712 = vmatprep.subr.bf16.mxu0 0
        %713 = vmatpush1.bf16.msra.mxu0 %v693
        %714 = vmatprep.subr.bf16.mxu0 0
        %715 = vmatpush1.bf16.msra.mxu0 %v694
        %716 = vmatprep.subr.bf16.mxu0 0
        %717 = vmatpush1.bf16.msra.mxu0 %v695
        %718 = vmatprep.subr.bf16.mxu0 0
        %719 = vmatpush1.bf16.msra.mxu0 %v696
        %720 = vmatprep.subr.bf16.mxu0 0
        %721 = vmatpush1.bf16.msra.mxu0 %v697
        %722 = vmatprep.subr.bf16.mxu0 0
        %723 = vmatpush1.bf16.msra.mxu0 0
        %724 = vmatprep.subr.bf16.mxu0 0
        %725 = vmatpush1.bf16.msra.mxu0 0
        %726 = vmatprep.subr.bf16.mxu0 0
        %727 = vmatpush1.bf16.msra.mxu0 0
        %728 = vmatprep.subr.bf16.mxu0 0
        %729 = vmatpush1.bf16.msra.mxu0 0
        %730 = vmatprep.subr.bf16.mxu0 0
        %731 = vmatpush1.bf16.msra.mxu0 0
        %732 = vmatprep.subr.bf16.mxu0 0
        %733 = vmatpush1.bf16.msra.mxu0 0
        %734 = vmatprep.subr.bf16.mxu0 0
        %735 = vmatpush1.bf16.msra.mxu0 0
        %736 = vmatprep.subr.bf16.mxu0 0
        %737 = vmatpush1.bf16.msra.mxu0 0
        %738 = vmatprep.mubr.bf16.mxu0 0
        %739 = vmatmul.mubr.bf16.gmra.mrb[0].mxu0 %v656
        %v740 = vpop.f32.mrb[0].mxu0
        %v741 = vadd.f32 %v646, %v740
        %v742 = vpop.f32.mrb[0].mxu0
        %v743 = vpop.f32.mrb[0].mxu0
        %v744 = vadd.f32 %v649, %v743
        %v745 = vpop.f32.mrb[0].mxu0
        %746 = vdwg.mxu0
        %v747 = vld [vmem:[%s4] sm:$0x1]
        %v749 = vlaneseq
        %v750 = vshrl.u32 %v749, 7
        %v751 = vsub.s32 0, %v750
        %v752 = vrot.slane %v747, %v751
        %v754 = vadd.f32 %v741, %v752
        %v755 = vadd.f32 %v744, %v752
        %v756 = vmul.f32 %v754, 1.442695
        %v757 = vpow.pop %v756
        %v758 = vmul.f32 %v755, 1.442695
        %v759 = vpow.pop %v758
        %v760 = vadd.f32 %v757, 1.0
        %v761 = vadd.f32 %v759, 1.0
        %v762 = vmul.f32 %v760, %v760
        %v763 = vmul.f32 %v761, %v761
        %v764 = vadd.f32 %v762, 1.0
        %v765 = vadd.f32 %v763, 1.0
        %v766 = vrcp.pop %v764
        %v767 = vrcp.pop %v765
        %v768 = vmul.f32 %v766, 2.0
        %v769 = vmul.f32 %v767, 2.0
        %v770 = vsub.f32 1.0, %v768
        %v771 = vsub.f32 1.0, %v769
        %v772 = vmul.f32 %v754, %v770
        %v773 = vmul.f32 %v755, %v771
        %v774 = vpack.c.bf16 %v773, %v772
        %v775 = vld [vmem:[#allocation10] sm:$0xf]
        %v776 = vld [vmem:[#allocation10 + $0x4] sm:$0xf]
        %v777 = vld [vmem:[#allocation10 + $0x8] sm:$0xf]
        %v778 = vld [vmem:[#allocation10 + $0xc] sm:$0xf]
        %v779 = vld [vmem:[#allocation10 + $0x10] sm:$0xf]
        %v780 = vld [vmem:[#allocation10 + $0x14] sm:$0xf]
        %v781 = vld [vmem:[#allocation10 + $0x18] sm:$0xf]
        %v782 = vld [vmem:[#allocation10 + $0x1c] sm:$0xf]
        %v783 = vld [vmem:[#allocation10 + $0x20] sm:$0xf]
        %v784 = vld [vmem:[#allocation10 + $0x24] sm:$0xf]
        %v785 = vld [vmem:[#allocation10 + $0x28] sm:$0xf]
        %v786 = vld [vmem:[#allocation10 + $0x2c] sm:$0xf]
        %v787 = vld [vmem:[#allocation10 + $0x30] sm:$0xf]
        %v788 = vld [vmem:[#allocation10 + $0x34] sm:$0xf]
        %v789 = vld [vmem:[#allocation10 + $0x38] sm:$0xf]
        %v790 = vld [vmem:[#allocation10 + $0x3c] sm:$0xf]
        %v791 = vld [vmem:[%s6] sm:$0x1]
        %v793 = vlaneseq
        %v794 = vshrl.u32 %v793, 7
        %v795 = vsub.s32 0, %v794
        %v796 = vrot.slane %v791, %v795
        %v814 = vunpack.c.l.b16 %v775
        %v815 = vunpack.c.l.b16 %v776
        %v816 = vunpack.c.l.b16 %v777
        %v817 = vunpack.c.l.b16 %v778
        %v818 = vunpack.c.l.b16 %v779
        %v819 = vunpack.c.l.b16 %v780
        %v820 = vunpack.c.l.b16 %v781
        %v821 = vunpack.c.l.b16 %v782
        %v822 = vunpack.c.l.b16 %v783
        %v823 = vunpack.c.l.b16 %v784
        %v824 = vunpack.c.l.b16 %v785
        %v825 = vunpack.c.l.b16 %v786
        %v826 = vunpack.c.l.b16 %v787
        %v827 = vunpack.c.l.b16 %v788
        %v828 = vunpack.c.l.b16 %v789
        %v829 = vunpack.c.l.b16 %v790
        %v830 = vpack.c.b16 %v815, %v814
        %v831 = vpack.c.b16 %v817, %v816
        %v832 = vpack.c.b16 %v819, %v818
        %v833 = vpack.c.b16 %v821, %v820
        %v834 = vpack.c.b16 %v823, %v822
        %v835 = vpack.c.b16 %v825, %v824
        %v836 = vpack.c.b16 %v827, %v826
        %v837 = vpack.c.b16 %v829, %v828
        %846 = vmatprep.subr.bf16.mxu0 0
        %847 = vmatpush1.bf16.msra.mxu0 %v830
        %848 = vmatprep.subr.bf16.mxu0 0
        %849 = vmatpush1.bf16.msra.mxu0 %v831
        %850 = vmatprep.subr.bf16.mxu0 0
        %851 = vmatpush1.bf16.msra.mxu0 %v832
        %852 = vmatprep.subr.bf16.mxu0 0
        %853 = vmatpush1.bf16.msra.mxu0 %v833
        %854 = vmatprep.subr.bf16.mxu0 0
        %855 = vmatpush1.bf16.msra.mxu0 %v834
        %856 = vmatprep.subr.bf16.mxu0 0
        %857 = vmatpush1.bf16.msra.mxu0 %v835
        %858 = vmatprep.subr.bf16.mxu0 0
        %859 = vmatpush1.bf16.msra.mxu0 %v836
        %860 = vmatprep.subr.bf16.mxu0 0
        %861 = vmatpush1.bf16.msra.mxu0 %v837
        %862 = vmatprep.subr.bf16.mxu0 0
        %863 = vmatpush1.bf16.msra.mxu0 0
        %864 = vmatprep.subr.bf16.mxu0 0
        %865 = vmatpush1.bf16.msra.mxu0 0
        %866 = vmatprep.subr.bf16.mxu0 0
        %867 = vmatpush1.bf16.msra.mxu0 0
        %868 = vmatprep.subr.bf16.mxu0 0
        %869 = vmatpush1.bf16.msra.mxu0 0
        %870 = vmatprep.subr.bf16.mxu0 0
        %871 = vmatpush1.bf16.msra.mxu0 0
        %872 = vmatprep.subr.bf16.mxu0 0
        %873 = vmatpush1.bf16.msra.mxu0 0
        %874 = vmatprep.subr.bf16.mxu0 0
        %875 = vmatpush1.bf16.msra.mxu0 0
        %876 = vmatprep.subr.bf16.mxu0 0
        %877 = vmatpush1.bf16.msra.mxu0 0
        %878 = vmatprep.mubr.bf16.mxu0 0
        %879 = vmatmul.mubr.bf16.gmra.mrb[0].mxu0 %v774
        %v880 = vpop.f32.mrb[0].mxu0
        %v881 = vadd.f32 %v796, %v880
        %v882 = vpop.f32.mrb[0].mxu0
        %v883 = vpop.f32.mrb[0].mxu0
        %v884 = vadd.f32 %v796, %v883
        %v885 = vpop.f32.mrb[0].mxu0
        %886 = vdwg.mxu0
        %v887 = vmul.f32 %v881, 1.442695
        %v888 = vpow.pop %v887
        %v889 = vmul.f32 %v884, 1.442695
        %v890 = vpow.pop %v889
        %v891 = vadd.f32 %v888, 1.0
        %v892 = vadd.f32 %v890, 1.0
        %v893 = vmul.f32 %v891, %v891
        %v894 = vmul.f32 %v892, %v892
        %v895 = vadd.f32 %v893, 1.0
        %v896 = vadd.f32 %v894, 1.0
        %v897 = vrcp.pop %v895
        %v898 = vrcp.pop %v896
        %v899 = vmul.f32 %v897, 2.0
        %v900 = vmul.f32 %v898, 2.0
        %v901 = vsub.f32 1.0, %v899
        %v902 = vsub.f32 1.0, %v900
        %v903 = vmul.f32 %v881, %v901
        %v904 = vmul.f32 %v884, %v902
        %v905 = vpack.c.bf16 %v904, %v903
        %v906 = vld [vmem:[#allocation11] sm:$0xf]
        %v907 = vld [vmem:[#allocation11 + $0x4] sm:$0xf]
        %v908 = vld [vmem:[#allocation11 + $0x8] sm:$0xf]
        %v909 = vld [vmem:[#allocation11 + $0xc] sm:$0xf]
        %v910 = vld [vmem:[#allocation11 + $0x10] sm:$0xf]
        %v911 = vld [vmem:[#allocation11 + $0x14] sm:$0xf]
        %v912 = vld [vmem:[#allocation11 + $0x18] sm:$0xf]
        %v913 = vld [vmem:[#allocation11 + $0x1c] sm:$0xf]
        %v914 = vld [vmem:[#allocation11 + $0x20] sm:$0xf]
        %v915 = vld [vmem:[#allocation11 + $0x24] sm:$0xf]
        %v916 = vld [vmem:[#allocation11 + $0x28] sm:$0xf]
        %v917 = vld [vmem:[#allocation11 + $0x2c] sm:$0xf]
        %v918 = vld [vmem:[#allocation11 + $0x30] sm:$0xf]
        %v919 = vld [vmem:[#allocation11 + $0x34] sm:$0xf]
        %v920 = vld [vmem:[#allocation11 + $0x38] sm:$0xf]
        %v921 = vld [vmem:[#allocation11 + $0x3c] sm:$0xf]
        %v922 = vld [vmem:[%s8] sm:$0x1]
        %v924 = vlaneseq
        %v925 = vshrl.u32 %v924, 7
        %v926 = vsub.s32 0, %v925
        %v927 = vrot.slane %v922, %v926
        %v945 = vunpack.c.l.b16 %v906
        %v946 = vunpack.c.l.b16 %v907
        %v947 = vunpack.c.l.b16 %v908
        %v948 = vunpack.c.l.b16 %v909
        %v949 = vunpack.c.l.b16 %v910
        %v950 = vunpack.c.l.b16 %v911
        %v951 = vunpack.c.l.b16 %v912
        %v952 = vunpack.c.l.b16 %v913
        %v953 = vunpack.c.l.b16 %v914
        %v954 = vunpack.c.l.b16 %v915
        %v955 = vunpack.c.l.b16 %v916
        %v956 = vunpack.c.l.b16 %v917
        %v957 = vunpack.c.l.b16 %v918
        %v958 = vunpack.c.l.b16 %v919
        %v959 = vunpack.c.l.b16 %v920
        %v960 = vunpack.c.l.b16 %v921
        %v961 = vpack.c.b16 %v946, %v945
        %v962 = vpack.c.b16 %v948, %v947
        %v963 = vpack.c.b16 %v950, %v949
        %v964 = vpack.c.b16 %v952, %v951
        %v965 = vpack.c.b16 %v954, %v953
        %v966 = vpack.c.b16 %v956, %v955
        %v967 = vpack.c.b16 %v958, %v957
        %v968 = vpack.c.b16 %v960, %v959
        %977 = vmatprep.subr.bf16.mxu0 0
        %978 = vmatpush1.bf16.msra.mxu0 %v961
        %979 = vmatprep.subr.bf16.mxu0 0
        %980 = vmatpush1.bf16.msra.mxu0 %v962
        %981 = vmatprep.subr.bf16.mxu0 0
        %982 = vmatpush1.bf16.msra.mxu0 %v963
        %983 = vmatprep.subr.bf16.mxu0 0
        %984 = vmatpush1.bf16.msra.mxu0 %v964
        %985 = vmatprep.subr.bf16.mxu0 0
        %986 = vmatpush1.bf16.msra.mxu0 %v965
        %987 = vmatprep.subr.bf16.mxu0 0
        %988 = vmatpush1.bf16.msra.mxu0 %v966
        %989 = vmatprep.subr.bf16.mxu0 0
        %990 = vmatpush1.bf16.msra.mxu0 %v967
        %991 = vmatprep.subr.bf16.mxu0 0
        %992 = vmatpush1.bf16.msra.mxu0 %v968
        %993 = vmatprep.subr.bf16.mxu0 0
        %994 = vmatpush1.bf16.msra.mxu0 0
        %995 = vmatprep.subr.bf16.mxu0 0
        %996 = vmatpush1.bf16.msra.mxu0 0
        %997 = vmatprep.subr.bf16.mxu0 0
        %998 = vmatpush1.bf16.msra.mxu0 0
        %999 = vmatprep.subr.bf16.mxu0 0
        %1000 = vmatpush1.bf16.msra.mxu0 0
        %1001 = vmatprep.subr.bf16.mxu0 0
        %1002 = vmatpush1.bf16.msra.mxu0 0
        %1003 = vmatprep.subr.bf16.mxu0 0
        %1004 = vmatpush1.bf16.msra.mxu0 0
        %1005 = vmatprep.subr.bf16.mxu0 0
        %1006 = vmatpush1.bf16.msra.mxu0 0
        %1007 = vmatprep.subr.bf16.mxu0 0
        %1008 = vmatpush1.bf16.msra.mxu0 0
        %1009 = vmatprep.mubr.bf16.mxu0 0
        %1010 = vmatmul.mubr.bf16.gmra.mrb[0].mxu0 %v905
        %v1011 = vpop.f32.mrb[0].mxu0
        %v1012 = vadd.f32 %v927, %v1011
        %v1013 = vpop.f32.mrb[0].mxu0
        %v1014 = vpop.f32.mrb[0].mxu0
        %v1015 = vadd.f32 %v927, %v1014
        %v1016 = vpop.f32.mrb[0].mxu0
        %1017 = vdwg.mxu0
        %v1018 = vmul.f32 %v1012, 1.442695
        %v1019 = vpow.pop %v1018
        %v1020 = vmul.f32 %v1015, 1.442695
        %v1021 = vpow.pop %v1020
        %v1022 = vadd.f32 %v1019, 1.0
        %v1023 = vadd.f32 %v1021, 1.0
        %v1024 = vmul.f32 %v1022, %v1022
        %v1025 = vmul.f32 %v1023, %v1023
        %v1026 = vadd.f32 %v1024, 1.0
        %v1027 = vadd.f32 %v1025, 1.0
        %v1028 = vrcp.pop %v1026
        %v1029 = vrcp.pop %v1027
        %v1030 = vmul.f32 %v1028, 2.0
        %v1031 = vmul.f32 %v1029, 2.0
        %v1032 = vsub.f32 1.0, %v1030
        %v1033 = vsub.f32 1.0, %v1031
        %v1034 = vmul.f32 %v1012, %v1032
        %v1035 = vmul.f32 %v1015, %v1033
        %v1036 = vpack.c.bf16 %v1035, %v1034
        %v1037 = vld [vmem:[#allocation13] sm:$0xf]
        %v1038 = vld [vmem:[#allocation13 + $0x4] sm:$0xf]
        %v1039 = vld [vmem:[#allocation13 + $0x8] sm:$0xf]
        %v1040 = vld [vmem:[#allocation13 + $0xc] sm:$0xf]
        %v1041 = vld [vmem:[#allocation13 + $0x10] sm:$0xf]
        %v1042 = vld [vmem:[#allocation13 + $0x14] sm:$0xf]
        %v1043 = vld [vmem:[#allocation13 + $0x18] sm:$0xf]
        %v1044 = vld [vmem:[#allocation13 + $0x1c] sm:$0xf]
        %v1045 = vld [vmem:[#allocation13 + $0x20] sm:$0xf]
        %v1046 = vld [vmem:[#allocation13 + $0x24] sm:$0xf]
        %v1047 = vld [vmem:[#allocation13 + $0x28] sm:$0xf]
        %v1048 = vld [vmem:[#allocation13 + $0x2c] sm:$0xf]
        %v1049 = vld [vmem:[#allocation13 + $0x30] sm:$0xf]
        %v1050 = vld [vmem:[#allocation13 + $0x34] sm:$0xf]
        %v1051 = vld [vmem:[#allocation13 + $0x38] sm:$0xf]
        %v1052 = vld [vmem:[#allocation13 + $0x3c] sm:$0xf]
        %v1053 = vld [vmem:[%s10] sm:$0x1]
        %v1055 = vlaneseq
        %v1056 = vshrl.u32 %v1055, 7
        %v1057 = vsub.s32 0, %v1056
        %v1058 = vrot.slane %v1053, %v1057
        %v1076 = vunpack.c.l.b16 %v1037
        %v1077 = vunpack.c.l.b16 %v1038
        %v1078 = vunpack.c.l.b16 %v1039
        %v1079 = vunpack.c.l.b16 %v1040
        %v1080 = vunpack.c.l.b16 %v1041
        %v1081 = vunpack.c.l.b16 %v1042
        %v1082 = vunpack.c.l.b16 %v1043
        %v1083 = vunpack.c.l.b16 %v1044
        %v1084 = vunpack.c.l.b16 %v1045
        %v1085 = vunpack.c.l.b16 %v1046
        %v1086 = vunpack.c.l.b16 %v1047
        %v1087 = vunpack.c.l.b16 %v1048
        %v1088 = vunpack.c.l.b16 %v1049
        %v1089 = vunpack.c.l.b16 %v1050
        %v1090 = vunpack.c.l.b16 %v1051
        %v1091 = vunpack.c.l.b16 %v1052
        %v1092 = vpack.c.b16 %v1077, %v1076
        %v1093 = vpack.c.b16 %v1079, %v1078
        %v1094 = vpack.c.b16 %v1081, %v1080
        %v1095 = vpack.c.b16 %v1083, %v1082
        %v1096 = vpack.c.b16 %v1085, %v1084
        %v1097 = vpack.c.b16 %v1087, %v1086
        %v1098 = vpack.c.b16 %v1089, %v1088
        %v1099 = vpack.c.b16 %v1091, %v1090
        %1108 = vmatprep.subr.bf16.mxu0 0
        %1109 = vmatpush1.bf16.msra.mxu0 %v1092
        %1110 = vmatprep.subr.bf16.mxu0 0
        %1111 = vmatpush1.bf16.msra.mxu0 %v1093
        %1112 = vmatprep.subr.bf16.mxu0 0
        %1113 = vmatpush1.bf16.msra.mxu0 %v1094
        %1114 = vmatprep.subr.bf16.mxu0 0
        %1115 = vmatpush1.bf16.msra.mxu0 %v1095
        %1116 = vmatprep.subr.bf16.mxu0 0
        %1117 = vmatpush1.bf16.msra.mxu0 %v1096
        %1118 = vmatprep.subr.bf16.mxu0 0
        %1119 = vmatpush1.bf16.msra.mxu0 %v1097
        %1120 = vmatprep.subr.bf16.mxu0 0
        %1121 = vmatpush1.bf16.msra.mxu0 %v1098
        %1122 = vmatprep.subr.bf16.mxu0 0
        %1123 = vmatpush1.bf16.msra.mxu0 %v1099
        %1124 = vmatprep.subr.bf16.mxu0 0
        %1125 = vmatpush1.bf16.msra.mxu0 0
        %1126 = vmatprep.subr.bf16.mxu0 0
        %1127 = vmatpush1.bf16.msra.mxu0 0
        %1128 = vmatprep.subr.bf16.mxu0 0
        %1129 = vmatpush1.bf16.msra.mxu0 0
        %1130 = vmatprep.subr.bf16.mxu0 0
        %1131 = vmatpush1.bf16.msra.mxu0 0
        %1132 = vmatprep.subr.bf16.mxu0 0
        %1133 = vmatpush1.bf16.msra.mxu0 0
        %1134 = vmatprep.subr.bf16.mxu0 0
        %1135 = vmatpush1.bf16.msra.mxu0 0
        %1136 = vmatprep.subr.bf16.mxu0 0
        %1137 = vmatpush1.bf16.msra.mxu0 0
        %1138 = vmatprep.subr.bf16.mxu0 0
        %1139 = vmatpush1.bf16.msra.mxu0 0
        %1140 = vmatprep.mubr.bf16.mxu0 0
        %1141 = vmatmul.mubr.bf16.gmra.mrb[0].mxu0 %v1036
        %v1142 = vpop.f32.mrb[0].mxu0
        %v1143 = vadd.f32 %v1058, %v1142
        %v1144 = vpop.f32.mrb[0].mxu0
        %v1145 = vpop.f32.mrb[0].mxu0
        %v1146 = vadd.f32 %v1058, %v1145
        %v1147 = vpop.f32.mrb[0].mxu0
        %1148 = vdwg.mxu0
        %v1149 = vmax.f32 %v1143, -1.0
        %v1150 = vmax.f32 %v1146, -1.0
        %v1151 = vmin.f32 %v1149, 1.0
        %v1152 = vmin.f32 %v1150, 1.0
        %1153 = vst [vmem:[%s516] sm:$0xff] %v1151
        %1154 = vst [vmem:[%s516 + $0x8] sm:$0xff] %v1152
        %s1155 = sand.u32 %s282, 1
        %s1156 = scalar_lea.sflag [#allocation4], %s1155
        %s1157 = sand.u32 %s282, 1
        %s1158 = smul.addr %s1157, 16
        %s1159 = scalar_lea.vmem [#allocation14], %s1158
        // Predicated region
        $region93: #{tpu_custom_call.1} parent=63 // pred_check
          %p1160 = pneg %p292
        $region94: #{tpu_custom_call.1} parent=63 // pred_check_branch
          %1162 = sbr.rel (%p1160) target = $region96
        $region95: #{tpu_custom_call.1} parent=63 // pred_region
          %s1163 = smul.u32 2, %s33
          %s1165 = ssub.s32 256, 256
          %1166 = vsyncadd %s1156, %s1165
          %s1167 = smul.addr %s1163, 128
          %s1168 = scalar_lea.hbm %s11, %s1167
          %s1169 = sshll.u32 %s1159, 4
          %s1170 = int_to_ptr.vmem [resolvable:$true] %s1169
          %1175 = dma.vmem_to_hbm [thread:$0]  %s1170, 256, %s1168, %s1156, 128, 128, 8
        $region96: #{tpu_custom_call.1} parent=63 // pred_fallthru
          _
      $region64: #{tpu_custom_call.1} parent=5 // pred_fallthru
        _
      %p1176 = scmp.le.s32.totalorder 2, %s28
      // Predicated region
      $region97: #{tpu_custom_call.1} parent=5 // pred_check
        %p1177 = pneg %p1176
      $region98: #{tpu_custom_call.1} parent=5 // pred_check_branch
        %1179 = sbr.rel (%p1177) target = $region100
      $region99: #{tpu_custom_call.1} parent=5 // pred_region
        %s1180 = ssub.s32 %s28, 2
        // Predicated region
        $region101: #{tpu_custom_call.1} parent=99 // pred_check
          %p1181 = pneg %p298
        $region102: #{tpu_custom_call.1} parent=99 // pred_check_branch
          %1183 = sbr.rel (%p1181) target = $region104
        $region103: #{tpu_custom_call.1} parent=99 // pred_region
          %s1184 = sand.u32 %s283, 1
          %s1185 = scalar_lea.sflag [#allocation4], %s1184
          %s1186 = sand.u32 %s283, 1
          %s1187 = smul.addr %s1186, 16
          %s1188 = scalar_lea.vmem [#allocation14], %s1187
          %1189 = dma.done %s1185, 256
        $region104: #{tpu_custom_call.1} parent=99 // pred_fallthru
          _
      $region100: #{tpu_custom_call.1} parent=5 // pred_fallthru
        _
    $region6: #{tpu_custom_call.1} parent=1 // loop_footer
      %s32 = sadd.s32 1, %s28
    $region7: #{tpu_custom_call.1} parent=1 // loop_footer_branch
      %27 = sbr.rel target = $region3
    $region8: #{tpu_custom_call.1} parent=1 // loop_exit
      _
    %1190 = vsyncpa [#allocation3], 1
    %s1191 = scalar_lea.sflag [#allocation3], 1
    %1192 = vsyncpa %s1191, 1
    %1193 = vsyncpa [#allocation6], 1
    %s1194 = scalar_lea.sflag [#allocation6], 1
    %1195 = vsyncpa %s1194, 1
    %1196 = vsyncpa [#allocation9], 1
    %1197 = vsyncpa [#allocation12], 1
    %1198 = vsyncpa [#allocation4], 1
    %s1199 = scalar_lea.sflag [#allocation4], 1
    %1200 = vsyncpa %s1199, 1

</llo_original>
